<compile_context>
chip_gen: v7x
topology: tpu7x:2x2x1
jax: 0.10.0
libtpu: 0.0.40
codegen_flags: <defaults>
</compile_context>

<pallas_src>
import functools

import jax
import jax.numpy as jnp
from jax import lax
from jax.experimental import pallas as pl
from jax.experimental.pallas import tpu as pltpu

_EPS = 1e-5


def _bf_ln_packed_kernel(x_ref, w_ref, m_ref, o_ref, *, inv_c):
    # x_ref: (tr, GC) lane-dense slab; each row holds G tokens of C channels.
    # w_ref: (1, GC)  = weight tiled G times (matches packed channel layout).
    # m_ref: (GC, GC) block-diagonal ones: M[i, j] = 1 iff i // C == j // C.
    x = x_ref[...].astype(jnp.float32)
    m = m_ref[...]
    # Segmented sum + broadcast in one MXU op per statistic.
    mu = jnp.dot(x, m, preferred_element_type=jnp.float32,
                 precision=lax.Precision.HIGHEST) * inv_c          # per-token mean
    xc = x - mu
    var = jnp.dot(xc * xc, m, preferred_element_type=jnp.float32,
                  precision=lax.Precision.HIGHEST) * inv_c         # unbiased=False
    inv = lax.rsqrt(var + _EPS)
    w = w_ref[...].astype(jnp.float32)
    # BiasFree: numerator is x (no mean subtraction), no bias term.
    o_ref[...] = (x * inv * w).astype(o_ref.dtype)


def _bf_ln_plain_kernel(x_ref, w_ref, o_ref, *, inv_c):
    # Fallback when C does not divide 128 (no lane packing): plain reductions.
    x = x_ref[...].astype(jnp.float32)
    mu = jnp.sum(x, axis=-1, keepdims=True) * inv_c
    xc = x - mu
    var = jnp.sum(xc * xc, axis=-1, keepdims=True) * inv_c
    inv = lax.rsqrt(var + _EPS)
    w = w_ref[...].astype(jnp.float32)
    o_ref[...] = (x * inv * w).astype(o_ref.dtype)


def biasfree_layernorm(x, weight, *, target_block_bytes=2 * 1024 * 1024):
    """BiasFree LayerNorm over the last dim. x: (..., C), weight: (C,)."""
    orig_shape = x.shape
    C = int(orig_shape[-1])
    rows = 1
    for s in orig_shape[:-1]:
        rows *= int(s)

    itemsize = jnp.dtype(x.dtype).itemsize
    sub = max(8, 32 // itemsize)              # sublane multiple: 8 f32 / 16 bf16 / 32 int8

    pack = (C < 128) and (128 % C == 0)
    G = (128 // C) if pack else 1             # tokens packed per 128-lane row
    GC = G * C

    x2 = x.reshape(rows, C)
    packed_rows = -(-rows // G)               # rows of the packed view (pre-padding)

    # Row tile of the packed slab: ~target_block_bytes per block, sublane-aligned,
    # never larger than the (padded) data.
    min_padded = -(-packed_rows // sub) * sub
    tr = max(sub, (target_block_bytes // max(1, GC * itemsize)) // sub * sub)
    tr = min(tr, min_padded)
    # If everything fits in one block, split in two so the "parallel" row axis can
    # still be sharded across the 2 TensorCores of a v7x chip.
    if -(-packed_rows // tr) < 2 and min_padded >= 2 * sub:
        tr = max(sub, (-(-(min_padded // 2) // sub)) * sub)
    grid = -(-packed_rows // tr)
    padded_packed_rows = grid * tr

    pad = padded_packed_rows * G - rows       # zero rows normalize to zero (no NaNs)
    if pad > 0:
        x2 = jnp.pad(x2, ((0, pad), (0, 0)))
    xp = x2.reshape(padded_packed_rows, GC)   # free reshape: data is contiguous

    w32 = weight.astype(jnp.float32).reshape(1, C)
    wp = jnp.tile(w32, (1, G))                # (1, GC): [w, w, ..., w]

    block_bytes = tr * GC * itemsize
    vmem_limit = int(min(64 * 1024 * 1024,    # v7x physical VMEM ceiling
                         max(32 * 1024 * 1024, 6 * block_bytes + 4 * 1024 * 1024)))

    ew_flops = 8 * padded_packed_rows * GC
    mm_flops = (4 * padded_packed_rows * GC * GC) if pack else (4 * padded_packed_rows * GC)
    cost = pl.CostEstimate(
        flops=int(ew_flops + mm_flops),
        transcendentals=int(padded_packed_rows * (GC if pack else 1)),
        bytes_accessed=int(2 * padded_packed_rows * GC * itemsize),
    )
    compiler_params = pltpu.CompilerParams(
        dimension_semantics=("parallel",),
        vmem_limit_bytes=vmem_limit,
    )
    out_shape = jax.ShapeDtypeStruct((padded_packed_rows, GC), x.dtype)

    if pack:
        lane_group = jnp.arange(GC, dtype=jnp.int32) // C
        m = (lane_group[:, None] == lane_group[None, :]).astype(jnp.float32)  # (GC, GC)
        out = pl.pallas_call(
            functools.partial(_bf_ln_packed_kernel, inv_c=1.0 / C),
            out_shape=out_shape,
            grid_spec=pltpu.PrefetchScalarGridSpec(
                num_scalar_prefetch=0,
                grid=(grid,),
                in_specs=[
                    pl.BlockSpec((tr, GC), lambda i: (i, 0)),
                    pl.BlockSpec((1, GC), lambda i: (0, 0)),
                    pl.BlockSpec((GC, GC), lambda i: (0, 0)),
                ],
                out_specs=pl.BlockSpec((tr, GC), lambda i: (i, 0)),
            ),
            compiler_params=compiler_params,
            cost_estimate=cost,
        )(xp, wp, m)
    else:
        out = pl.pallas_call(
            functools.partial(_bf_ln_plain_kernel, inv_c=1.0 / C),
            out_shape=out_shape,
            grid_spec=pltpu.PrefetchScalarGridSpec(
                num_scalar_prefetch=0,
                grid=(grid,),
                in_specs=[
                    pl.BlockSpec((tr, GC), lambda i: (i, 0)),
                    pl.BlockSpec((1, GC), lambda i: (0, 0)),
                ],
                out_specs=pl.BlockSpec((tr, GC), lambda i: (i, 0)),
            ),
            compiler_params=compiler_params,
            cost_estimate=cost,
        )(xp, wp)

    out2 = out.reshape(padded_packed_rows * G, C)
    if pad > 0:
        out2 = out2[:rows]
    return out2.reshape(orig_shape)


def _reference(x, weight):
    xf = x.astype(jnp.float32)
    mu = jnp.mean(xf, axis=-1, keepdims=True)
    var = jnp.mean((xf - mu) ** 2, axis=-1, keepdims=True)          # unbiased=False
    y = xf / jnp.sqrt(var + _EPS) * weight.astype(jnp.float32)      # BiasFree: x, not x - mu
    return y.astype(x.dtype)


if __name__ == "__main__":
    key = jax.random.PRNGKey(0)
    kx, kw, kx2, kx3 = jax.random.split(key, 4)

    # Main case: module's usage in the "to_3d" view (B, H*W, C) with C=32.
    B, H, W, C = 2, 8, 8, 32
    x = jax.random.normal(kx, (B, H * W, C), dtype=jnp.float32)
    weight = jnp.ones((C,), jnp.float32) + 0.1 * jax.random.normal(kw, (C,), jnp.float32)

    out = jax.block_until_ready(biasfree_layernorm(x, weight))
    ref = _reference(x, weight)
    assert out.shape == x.shape and out.dtype == x.dtype
    assert jnp.allclose(out, ref, atol=1e-4, rtol=1e-4), "mismatch vs reference (packed path)"

    # Odd token count -> exercises zero-padding + multi-step grid on the packed path.
    x_odd = jax.random.normal(kx2, (3, 5, 7, 32), dtype=jnp.float32)
    w_odd = jnp.ones((32,), jnp.float32)
    out_odd = jax.block_until_ready(biasfree_layernorm(x_odd, w_odd))
    assert jnp.allclose(out_odd, _reference(x_odd, w_odd), atol=1e-4, rtol=1e-4), \
        "mismatch vs reference (padded packed path)"

    # Channel count that does not divide 128 -> plain (unpacked) fallback path.
    x_c48 = jax.random.normal(kx3, (2, 10, 48), dtype=jnp.float32)
    w_c48 = 1.0 + 0.05 * jnp.arange(48, dtype=jnp.float32) / 48.0
    out_c48 = jax.block_until_ready(biasfree_layernorm(x_c48, w_c48))
    assert jnp.allclose(out_c48, _reference(x_c48, w_c48), atol=1e-4, rtol=1e-4), \
        "mismatch vs reference (plain path)"

    print("KERNEL_OK")
</pallas_src>

<mosaic_0001>
module attributes {stable_mosaic.version = 11 : i64} {
  func.func @_bf_ln_packed_kernel(%arg0: i32, %arg1: memref<16x128xf32, #tpu.memory_space<vmem>>, %arg2: memref<1x128xf32, #tpu.memory_space<vmem>>, %arg3: memref<128x128xf32, #tpu.memory_space<vmem>>, %arg4: memref<16x128xf32, #tpu.memory_space<vmem>>) attributes {dimension_semantics = [#tpu.dimension_semantics<parallel>], iteration_bounds = array<i64: 2>, scalar_prefetch = 0 : i64, scratch_operands = 0 : i64, tpu.core_type = #tpu.core_type<tc>, window_params = [{transform_indices = @transform_0, window_bounds = array<i64: 16, 128>}, {pipeline_mode = #tpu.pipeline_mode<synchronous>, transform_indices = @transform_1, window_bounds = array<i64: 1, 128>}, {pipeline_mode = #tpu.pipeline_mode<synchronous>, transform_indices = @transform_2, window_bounds = array<i64: 128, 128>}, {transform_indices = @transform_3, window_bounds = array<i64: 16, 128>}]} {
    %c0 = arith.constant 0 : index
    %c0_0 = arith.constant 0 : index
    %0 = vector.load %arg1[%c0, %c0_0] : memref<16x128xf32, #tpu.memory_space<vmem>>, vector<16x128xf32>
    %c0_1 = arith.constant 0 : index
    %c0_2 = arith.constant 0 : index
    %1 = vector.load %arg3[%c0_1, %c0_2] : memref<128x128xf32, #tpu.memory_space<vmem>>, vector<128x128xf32>
    %cst = arith.constant dense<0.000000e+00> : vector<16x128xf32>
    %2 = tpu.matmul %0, %1, %cst {dimension_numbers = #tpu.dot_dimension_numbers<[1], [0], [0], [1], [0, 0, 1, 1], [], []>, precision = #tpu.contract_precision<fp32>} : vector<16x128xf32>, vector<128x128xf32>, vector<16x128xf32> -> vector<16x128xf32>
    %cst_3 = arith.constant 3.125000e-02 : f32
    %3 = vector.broadcast %cst_3 : f32 to vector<16x128xf32>
    %4 = arith.mulf %2, %3 : vector<16x128xf32>
    %5 = arith.subf %0, %4 : vector<16x128xf32>
    %6 = arith.mulf %5, %5 : vector<16x128xf32>
    %cst_4 = arith.constant dense<0.000000e+00> : vector<16x128xf32>
    %7 = tpu.matmul %6, %1, %cst_4 {dimension_numbers = #tpu.dot_dimension_numbers<[1], [0], [0], [1], [0, 0, 1, 1], [], []>, precision = #tpu.contract_precision<fp32>} : vector<16x128xf32>, vector<128x128xf32>, vector<16x128xf32> -> vector<16x128xf32>
    %cst_5 = arith.constant 3.125000e-02 : f32
    %8 = vector.broadcast %cst_5 : f32 to vector<16x128xf32>
    %9 = arith.mulf %7, %8 : vector<16x128xf32>
    %cst_6 = arith.constant 9.99999974E-6 : f32
    %10 = vector.broadcast %cst_6 : f32 to vector<16x128xf32>
    %11 = arith.addf %9, %10 : vector<16x128xf32>
    %12 = math.rsqrt %11 : vector<16x128xf32>
    %c0_7 = arith.constant 0 : index
    %c0_8 = arith.constant 0 : index
    %13 = vector.load %arg2[%c0_7, %c0_8] : memref<1x128xf32, #tpu.memory_space<vmem>>, vector<1x128xf32>
    %14 = arith.mulf %0, %12 : vector<16x128xf32>
    %15 = vector.broadcast %13 : vector<1x128xf32> to vector<16x128xf32>
    %16 = arith.mulf %14, %15 : vector<16x128xf32>
    %c0_9 = arith.constant 0 : index
    %c0_10 = arith.constant 0 : index
    %17 = vector.load %arg4[%c0_9, %c0_10] : memref<16x128xf32, #tpu.memory_space<vmem>>, vector<16x128xf32>
    tpu.vector_store %arg4[%c0_9, %c0_10], %16 {strides = array<i32>} : memref<16x128xf32, #tpu.memory_space<vmem>>, vector<16x128xf32>,
    return
  }
  func.func @transform_0(%arg0: i32) -> (i32, i32) {
    %c0_i32 = arith.constant 0 : i32
    %c0_i32_0 = arith.constant 0 : i32
    return %arg0, %c0_i32 : i32, i32
  }
  func.func @transform_1(%arg0: i32) -> (i32, i32) {
    %c0_i32 = arith.constant 0 : i32
    %c0_i32_0 = arith.constant 0 : i32
    %c0_i32_1 = arith.constant 0 : i32
    return %c0_i32, %c0_i32_0 : i32, i32
  }
  func.func @transform_2(%arg0: i32) -> (i32, i32) {
    %c0_i32 = arith.constant 0 : i32
    %c0_i32_0 = arith.constant 0 : i32
    %c0_i32_1 = arith.constant 0 : i32
    return %c0_i32, %c0_i32_0 : i32, i32
  }
  func.func @transform_3(%arg0: i32) -> (i32, i32) {
    %c0_i32 = arith.constant 0 : i32
    %c0_i32_0 = arith.constant 0 : i32
    return %arg0, %c0_i32 : i32, i32
  }
}

</mosaic_0001>

<llo_original>
// kernel: tpu_custom_call.1
$region0: #{tpu_custom_call.1}
  #allocation0 [shape = 'u32[]', space=smem, size = 0x4, offset = 0x4, fixed_abs, tag = 'smem constant byte address 0x4 - core index']
  #allocation1 [shape = 'u32[144,128]{1,0:T(1,128)}', space=vmem, size = 0x12000, scoped, tag = 'internal scratch']
  %s0 = inlined_call_operand.hbm [shape: f32[32,128], index: 0, kind: input, shape index: {}]
  %s1 = inlined_call_operand.vmem [shape: f32[1,128], index: 1, kind: input, shape index: {}]
  %s2 = inlined_call_operand.hbm [shape: f32[128,128], index: 2, kind: input, shape index: {}]
  %s3 = inlined_call_operand.hbm [shape: f32[32,128], index: 3, kind: output, shape index: {}]
  %s4 = sld [smem:[#allocation0]]
  $region53: #{tpu_custom_call.1} parent=0
    _
  %s6 = ssub.s32 1, %s4
  %s7 = scalar_select 0, %s6, %s4
  $region1: #{tpu_custom_call.1} parent=0
    #allocation2 [shape = 'u8[16384]{0}', space=vmem, size = 0x4000, scoped, tag = 'input window, operand 0']
    #allocation3 [shape = 's32[2]{0}', space=sflag, size = 0x8, scoped, tag = 'scoped memory for tpu_custom_call.1']
    #allocation4 [shape = 's32[2]{0}', space=sflag, size = 0x8, scoped, tag = 'scoped memory for tpu_custom_call.1']
    #allocation5 [shape = 'u8[65536]{0}', space=vmem, size = 0x10000, scoped, tag = 'input window, operand 2, single buffered']
    #allocation6 [shape = 's32[1]{0}', space=sflag, size = 0x4, scoped, tag = 'scoped memory for tpu_custom_call.1']
    #allocation7 [shape = 'u8[16384]{0}', space=vmem, size = 0x4000, scoped, tag = 'output window, operand 0']
    %8 = vsyncpa [#allocation3], 0
    %s9 = scalar_lea.sflag [#allocation3], 1
    %10 = vsyncpa %s9, 0
    %11 = vsyncpa [#allocation6], 0
    %12 = vsyncpa [#allocation4], 0
    %s13 = scalar_lea.sflag [#allocation4], 1
    %14 = vsyncpa %s13, 0
    loop: start=0, step=1, limit=4
    $region2: #{tpu_custom_call.1} parent=1 // loop_pre_header
      _
    $region3: #{tpu_custom_call.1} parent=1 // loop_header
      %s16 = sphi 0, %s20
      %p17 = scmp.ge.s32.totalorder %s16, 4
      %s26 = sphi 0, %s28
      %s29 = sphi 0, %s26
      %s30 = sphi 0, %s29
      %s46 = sphi 0, %s30
      %s50 = sphi 0, %s50
      %s52 = sphi 0, %s50
      %s53 = sphi 0, %s52
      %s67 = sphi 0, %s53
      %s71 = sphi 0, %s71
      %s73 = sphi 0, %s71
      %s74 = sphi 0, %s73
      %s88 = sphi 0, %s74
      %s94 = sphi 0, %s96
      %s97 = sphi 0, %s94
      %s98 = sphi 0, %s97
      %s114 = sphi 0, %s98
    $region4: #{tpu_custom_call.1} parent=1 // loop_header_branch
      %19 = sbr.rel (%p17) target = $region8
    $region5: #{tpu_custom_call.1} parent=1 // loop_body
      %s21 = ssub.s32 %s16, 1
      %s22 = ssub.s32 %s16, 2
      %s23 = sadd.s32 %s16, 1
      %s24 = ssub.s32 %s16, %s23
      %p25 = scmp.eq.s32.totalorder %s24, 0
      %s27 = sadd.s32 %s26, 1
      %s28 = scalar_select %p25, %s26, %s27
      %p31 = pneg %p25
      %p32 = scmp.eq.s32.totalorder %s16, 1
      %p33 = por %p31, %p32
      %p34 = scmp.ne.s32.totalorder %s26, %s29
      %p35 = scmp.eq.s32.totalorder %s16, 0
      %p36 = por %p34, %p35
      %p37 = scmp.ne.s32.totalorder %s26, %s29
      %p38 = scmp.eq.s32.totalorder %s21, 1
      %p39 = por %p37, %p38
      %p40 = scmp.ne.s32.totalorder %s29, %s30
      %p41 = scmp.eq.s32.totalorder %s21, 0
      %p42 = por %p40, %p41
      %p43 = scmp.ne.s32.totalorder %s29, %s30
      %p44 = scmp.eq.s32.totalorder %s22, 1
      %p45 = por %p43, %p44
      %p47 = scmp.ne.s32.totalorder %s30, %s46
      %p48 = scmp.eq.s32.totalorder %s22, 0
      %p49 = por %p47, %p48
      %s51 = sadd.s32 %s50, 1
      %p54 = scmp.eq.s32.totalorder %s16, 1
      %p55 = scmp.ne.s32.totalorder %s50, %s52
      %p56 = scmp.eq.s32.totalorder %s16, 0
      %p57 = por %p55, %p56
      %p58 = scmp.ne.s32.totalorder %s50, %s52
      %p59 = scmp.eq.s32.totalorder %s21, 1
      %p60 = por %p58, %p59
      %p61 = scmp.ne.s32.totalorder %s52, %s53
      %p62 = scmp.eq.s32.totalorder %s21, 0
      %p63 = por %p61, %p62
      %p64 = scmp.ne.s32.totalorder %s52, %s53
      %p65 = scmp.eq.s32.totalorder %s22, 1
      %p66 = por %p64, %p65
      %p68 = scmp.ne.s32.totalorder %s53, %s67
      %p69 = scmp.eq.s32.totalorder %s22, 0
      %p70 = por %p68, %p69
      %s72 = sadd.s32 %s71, 1
      %p75 = scmp.eq.s32.totalorder %s16, 1
      %p76 = scmp.ne.s32.totalorder %s71, %s73
      %p77 = scmp.eq.s32.totalorder %s16, 0
      %p78 = por %p76, %p77
      %p79 = scmp.ne.s32.totalorder %s71, %s73
      %p80 = scmp.eq.s32.totalorder %s21, 1
      %p81 = por %p79, %p80
      %p82 = scmp.ne.s32.totalorder %s73, %s74
      %p83 = scmp.eq.s32.totalorder %s21, 0
      %p84 = por %p82, %p83
      %p85 = scmp.ne.s32.totalorder %s73, %s74
      %p86 = scmp.eq.s32.totalorder %s22, 1
      %p87 = por %p85, %p86
      %p89 = scmp.ne.s32.totalorder %s74, %s88
      %p90 = scmp.eq.s32.totalorder %s22, 0
      %p91 = por %p89, %p90
      %s92 = ssub.s32 %s16, %s23
      %p93 = scmp.eq.s32.totalorder %s92, 0
      %s95 = sadd.s32 %s94, 1
      %s96 = scalar_select %p93, %s94, %s95
      %p99 = pneg %p93
      %p100 = scmp.eq.s32.totalorder %s16, 1
      %p101 = por %p99, %p100
      %p102 = scmp.ne.s32.totalorder %s94, %s97
      %p103 = scmp.eq.s32.totalorder %s16, 0
      %p104 = por %p102, %p103
      %p105 = scmp.ne.s32.totalorder %s94, %s97
      %p106 = scmp.eq.s32.totalorder %s21, 1
      %p107 = por %p105, %p106
      %p108 = scmp.ne.s32.totalorder %s97, %s98
      %p109 = scmp.eq.s32.totalorder %s21, 0
      %p110 = por %p108, %p109
      %p111 = scmp.ne.s32.totalorder %s97, %s98
      %p112 = scmp.eq.s32.totalorder %s22, 1
      %p113 = por %p111, %p112
      %p115 = scmp.ne.s32.totalorder %s98, %s114
      %p116 = scmp.eq.s32.totalorder %s22, 0
      %p117 = por %p115, %p116
      %p118 = scmp.le.s32.totalorder 1, %s16
      %p119 = scmp.lt.s32.totalorder %s16, 3
      %p120 = pnand %p118, %p119
      %p121 = pneg %p120
      // Predicated region
      $region9: #{tpu_custom_call.1} parent=5 // pred_check
        _
      $region10: #{tpu_custom_call.1} parent=5 // pred_check_branch
        %123 = sbr.rel (%p120) target = $region12
      $region11: #{tpu_custom_call.1} parent=5 // pred_region
        %s124 = ssub.s32 %s16, 1
        // Predicated region
        $region13: #{tpu_custom_call.1} parent=11 // pred_check
          %p125 = pneg %p63
        $region14: #{tpu_custom_call.1} parent=11 // pred_check_branch
          %127 = sbr.rel (%p125) target = $region16
        $region15: #{tpu_custom_call.1} parent=11 // pred_region
          _
        $region16: #{tpu_custom_call.1} parent=11 // pred_fallthru
          _
        // Predicated region
        $region17: #{tpu_custom_call.1} parent=11 // pred_check
          %p128 = pneg %p84
        $region18: #{tpu_custom_call.1} parent=11 // pred_check_branch
          %130 = sbr.rel (%p128) target = $region20
        $region19: #{tpu_custom_call.1} parent=11 // pred_region
          %s132 = ssub.s32 2048, 2048
          %133 = vsyncadd [#allocation6], %s132
          %s134 = sshll.u32 [#allocation5], 4
          %s135 = int_to_ptr.vmem [resolvable:$true] %s134
          %140 = dma.hbm_to_vmem [thread:$0]  %s2, 2048, %s135, [#allocation6], 128, 128, 8
        $region20: #{tpu_custom_call.1} parent=11 // pred_fallthru
          _
      $region12: #{tpu_custom_call.1} parent=5 // pred_fallthru
        _
      %p141 = scmp.lt.s32.totalorder %s16, 2
      // Predicated region
      $region21: #{tpu_custom_call.1} parent=5 // pred_check
        %p142 = pneg %p141
      $region22: #{tpu_custom_call.1} parent=5 // pred_check_branch
        %144 = sbr.rel (%p142) target = $region24
      $region23: #{tpu_custom_call.1} parent=5 // pred_region
        // Predicated region
        $region25: #{tpu_custom_call.1} parent=23 // pred_check
          %p145 = pneg %p36
        $region26: #{tpu_custom_call.1} parent=23 // pred_check_branch
          %147 = sbr.rel (%p145) target = $region28
        $region27: #{tpu_custom_call.1} parent=23 // pred_region
          %s148 = sand.u32 %s26, 1
          %s149 = scalar_lea.sflag [#allocation3], %s148
          %s150 = sand.u32 %s26, 1
          %s151 = smul.addr %s150, 16
          %s152 = scalar_lea.vmem [#allocation2], %s151
          %s153 = smul.u32 2, %s16
          %s155 = ssub.s32 256, 256
          %156 = vsyncadd %s149, %s155
          %s157 = smul.addr %s153, 128
          %s158 = scalar_lea.hbm %s0, %s157
          %s159 = sshll.u32 %s152, 4
          %s160 = int_to_ptr.vmem [resolvable:$true] %s159
          %165 = dma.hbm_to_vmem [thread:$0]  %s158, 256, %s160, %s149, 128, 128, 8
        $region28: #{tpu_custom_call.1} parent=23 // pred_fallthru
          _
      $region24: #{tpu_custom_call.1} parent=5 // pred_fallthru
        _
      %p166 = scmp.le.s32.totalorder 1, %s16
      %p167 = scmp.lt.s32.totalorder %s16, 3
      %p168 = pnand %p166, %p167
      %p169 = pneg %p168
      // Predicated region
      $region29: #{tpu_custom_call.1} parent=5 // pred_check
        _
      $region30: #{tpu_custom_call.1} parent=5 // pred_check_branch
        %171 = sbr.rel (%p168) target = $region32
      $region31: #{tpu_custom_call.1} parent=5 // pred_region
        %s172 = ssub.s32 %s16, 1
        %s173 = sand.u32 %s29, 1
        %s174 = scalar_lea.sflag [#allocation3], %s173
        %s175 = sand.u32 %s29, 1
        %s176 = smul.addr %s175, 16
        %s177 = scalar_lea.vmem [#allocation2], %s176
        // Predicated region
        $region33: #{tpu_custom_call.1} parent=31 // pred_check
          %p178 = pneg %p42
        $region34: #{tpu_custom_call.1} parent=31 // pred_check_branch
          %180 = sbr.rel (%p178) target = $region36
        $region35: #{tpu_custom_call.1} parent=31 // pred_region
          %181 = dma.done %s174, 256
        $region36: #{tpu_custom_call.1} parent=31 // pred_fallthru
          _
        // Predicated region
        $region37: #{tpu_custom_call.1} parent=31 // pred_check
          %p182 = pneg %p84
        $region38: #{tpu_custom_call.1} parent=31 // pred_check_branch
          %184 = sbr.rel (%p182) target = $region40
        $region39: #{tpu_custom_call.1} parent=31 // pred_region
          %185 = dma.done [#allocation6], 2048
        $region40: #{tpu_custom_call.1} parent=31 // pred_fallthru
          _
        %s186 = sand.u32 %s29, 1
        %s187 = scalar_lea.sflag [#allocation3], %s186
        %s188 = sand.u32 %s29, 1
        %s189 = smul.addr %s188, 16
        %s190 = scalar_lea.vmem [#allocation2], %s189
        %p191 = pneg %p42
        %p192 = pneg %p39
        %p193 = pneg %p63
        %p194 = pneg %p60
        %p195 = pneg %p84
        %p196 = pneg %p81
        %p197 = pneg %p110
        %p198 = pneg %p107
        %s199 = sand.u32 %s97, 1
        %s200 = scalar_lea.sflag [#allocation4], %s199
        %s201 = sand.u32 %s97, 1
        %s202 = smul.addr %s201, 16
        %s203 = scalar_lea.vmem [#allocation7], %s202
        %s204 = smul.u32 2, %s21
        %s205 = smul.u32 2, %s21
        %v206 = vld [vmem:[%s177] sm:$0xff]
        %v207 = vld [vmem:[%s177 + $0x8] sm:$0xff]
        %v208 = vld [vmem:[#allocation5] sm:$0xff]
        %v209 = vld [vmem:[#allocation5 + $0x8] sm:$0xff]
        %v210 = vld [vmem:[#allocation5 + $0x10] sm:$0xff]
        %v211 = vld [vmem:[#allocation5 + $0x18] sm:$0xff]
        %v212 = vld [vmem:[#allocation5 + $0x20] sm:$0xff]
        %v213 = vld [vmem:[#allocation5 + $0x28] sm:$0xff]
        %v214 = vld [vmem:[#allocation5 + $0x30] sm:$0xff]
        %v215 = vld [vmem:[#allocation5 + $0x38] sm:$0xff]
        %v216 = vld [vmem:[#allocation5 + $0x40] sm:$0xff]
        %v217 = vld [vmem:[#allocation5 + $0x48] sm:$0xff]
        %v218 = vld [vmem:[#allocation5 + $0x50] sm:$0xff]
        %v219 = vld [vmem:[#allocation5 + $0x58] sm:$0xff]
        %v220 = vld [vmem:[#allocation5 + $0x60] sm:$0xff]
        %v221 = vld [vmem:[#allocation5 + $0x68] sm:$0xff]
        %v222 = vld [vmem:[#allocation5 + $0x70] sm:$0xff]
        %v223 = vld [vmem:[#allocation5 + $0x78] sm:$0xff]
        %224 = vmatprep.subr.mxu0 0.0
        %v225 = vand.u32 %v208, 4294901760
        %226 = vmatpush1.msra.mxu0 %v225
        %227 = vmatprep.subr.mxu0 0.0
        %v228 = vand.u32 %v209, 4294901760
        %229 = vmatpush1.msra.mxu0 %v228
        %230 = vmatprep.subr.mxu0 0.0
        %v231 = vand.u32 %v210, 4294901760
        %232 = vmatpush1.msra.mxu0 %v231
        %233 = vmatprep.subr.mxu0 0.0
        %v234 = vand.u32 %v211, 4294901760
        %235 = vmatpush1.msra.mxu0 %v234
        %236 = vmatprep.subr.mxu0 0.0
        %v237 = vand.u32 %v212, 4294901760
        %238 = vmatpush1.msra.mxu0 %v237
        %239 = vmatprep.subr.mxu0 0.0
        %v240 = vand.u32 %v213, 4294901760
        %241 = vmatpush1.msra.mxu0 %v240
        %242 = vmatprep.subr.mxu0 0.0
        %v243 = vand.u32 %v214, 4294901760
        %244 = vmatpush1.msra.mxu0 %v243
        %245 = vmatprep.subr.mxu0 0.0
        %v246 = vand.u32 %v215, 4294901760
        %247 = vmatpush1.msra.mxu0 %v246
        %248 = vmatprep.subr.mxu0 0.0
        %v249 = vand.u32 %v216, 4294901760
        %250 = vmatpush1.msra.mxu0 %v249
        %251 = vmatprep.subr.mxu0 0.0
        %v252 = vand.u32 %v217, 4294901760
        %253 = vmatpush1.msra.mxu0 %v252
        %254 = vmatprep.subr.mxu0 0.0
        %v255 = vand.u32 %v218, 4294901760
        %256 = vmatpush1.msra.mxu0 %v255
        %257 = vmatprep.subr.mxu0 0.0
        %v258 = vand.u32 %v219, 4294901760
        %259 = vmatpush1.msra.mxu0 %v258
        %260 = vmatprep.subr.mxu0 0.0
        %v261 = vand.u32 %v220, 4294901760
        %262 = vmatpush1.msra.mxu0 %v261
        %263 = vmatprep.subr.mxu0 0.0
        %v264 = vand.u32 %v221, 4294901760
        %265 = vmatpush1.msra.mxu0 %v264
        %266 = vmatprep.subr.mxu0 0.0
        %v267 = vand.u32 %v222, 4294901760
        %268 = vmatpush1.msra.mxu0 %v267
        %269 = vmatprep.subr.mxu0 0.0
        %v270 = vand.u32 %v223, 4294901760
        %271 = vmatpush1.msra.mxu0 %v270
        %272 = vmatprep.subr.mxu0 0.0
        %273 = vmatpush1.msra.mxu0 0.0
        %274 = vmatprep.subr.mxu0 0.0
        %275 = vmatpush1.msra.mxu0 0.0
        %276 = vmatprep.subr.mxu0 0.0
        %277 = vmatpush1.msra.mxu0 0.0
        %278 = vmatprep.subr.mxu0 0.0
        %279 = vmatpush1.msra.mxu0 0.0
        %280 = vmatprep.subr.mxu0 0.0
        %281 = vmatpush1.msra.mxu0 0.0
        %282 = vmatprep.subr.mxu0 0.0
        %283 = vmatpush1.msra.mxu0 0.0
        %284 = vmatprep.subr.mxu0 0.0
        %285 = vmatpush1.msra.mxu0 0.0
        %286 = vmatprep.subr.mxu0 0.0
        %287 = vmatpush1.msra.mxu0 0.0
        %288 = vmatprep.subr.mxu0 0.0
        %289 = vmatpush1.msra.mxu0 0.0
        %290 = vmatprep.subr.mxu0 0.0
        %291 = vmatpush1.msra.mxu0 0.0
        %292 = vmatprep.subr.mxu0 0.0
        %293 = vmatpush1.msra.mxu0 0.0
        %294 = vmatprep.subr.mxu0 0.0
        %295 = vmatpush1.msra.mxu0 0.0
        %296 = vmatprep.subr.mxu0 0.0
        %297 = vmatpush1.msra.mxu0 0.0
        %298 = vmatprep.subr.mxu0 0.0
        %299 = vmatpush1.msra.mxu0 0.0
        %300 = vmatprep.subr.mxu0 0.0
        %301 = vmatpush1.msra.mxu0 0.0
        %302 = vmatprep.subr.mxu0 0.0
        %303 = vmatpush1.msra.mxu0 0.0
        %304 = vmatprep.mubr.f32.mxu0 0.0
        %v305 = vand.u32 %v206, 4294901760
        %v306 = vsub.f32 %v206, %v305
        %v307 = vand.u32 %v306, 4294901760
        %v308 = vsub.f32 %v306, %v307
        %v309 = vand.u32 %v308, 4294901760
        %310 = vmatmul.mubr.f32.gmra.mrb[0].mxu0 %v309
        %v311 = vpop.f32.mrb[0].mxu0
        %v312 = vadd.f32 0.0, %v311
        %v313 = vpop.f32.mrb[0].mxu0
        %314 = vmatprep.mubr.f32.mxu0 0.0
        %v315 = vand.u32 %v207, 4294901760
        %v316 = vsub.f32 %v207, %v315
        %v317 = vand.u32 %v316, 4294901760
        %v318 = vsub.f32 %v316, %v317
        %v319 = vand.u32 %v318, 4294901760
        %320 = vmatmul.mubr.f32.gmra.mrb[0].mxu0 %v319
        %v321 = vpop.f32.mrb[0].mxu0
        %v322 = vadd.f32 0.0, %v321
        %v323 = vpop.f32.mrb[0].mxu0
        %324 = vdwg.mxu0
        %325 = vmatprep.subr.mxu0 0.0
        %v326 = vand.u32 %v208, 4294901760
        %v327 = vsub.f32 %v208, %v326
        %v328 = vand.u32 %v327, 4294901760
        %v329 = vsub.f32 %v327, %v328
        %v330 = vand.u32 %v329, 4294901760
        %331 = vmatpush1.msra.mxu0 %v330
        %332 = vmatprep.subr.mxu0 0.0
        %v333 = vand.u32 %v209, 4294901760
        %v334 = vsub.f32 %v209, %v333
        %v335 = vand.u32 %v334, 4294901760
        %v336 = vsub.f32 %v334, %v335
        %v337 = vand.u32 %v336, 4294901760
        %338 = vmatpush1.msra.mxu0 %v337
        %339 = vmatprep.subr.mxu0 0.0
        %v340 = vand.u32 %v210, 4294901760
        %v341 = vsub.f32 %v210, %v340
        %v342 = vand.u32 %v341, 4294901760
        %v343 = vsub.f32 %v341, %v342
        %v344 = vand.u32 %v343, 4294901760
        %345 = vmatpush1.msra.mxu0 %v344
        %346 = vmatprep.subr.mxu0 0.0
        %v347 = vand.u32 %v211, 4294901760
        %v348 = vsub.f32 %v211, %v347
        %v349 = vand.u32 %v348, 4294901760
        %v350 = vsub.f32 %v348, %v349
        %v351 = vand.u32 %v350, 4294901760
        %352 = vmatpush1.msra.mxu0 %v351
        %353 = vmatprep.subr.mxu0 0.0
        %v354 = vand.u32 %v212, 4294901760
        %v355 = vsub.f32 %v212, %v354
        %v356 = vand.u32 %v355, 4294901760
        %v357 = vsub.f32 %v355, %v356
        %v358 = vand.u32 %v357, 4294901760
        %359 = vmatpush1.msra.mxu0 %v358
        %360 = vmatprep.subr.mxu0 0.0
        %v361 = vand.u32 %v213, 4294901760
        %v362 = vsub.f32 %v213, %v361
        %v363 = vand.u32 %v362, 4294901760
        %v364 = vsub.f32 %v362, %v363
        %v365 = vand.u32 %v364, 4294901760
        %366 = vmatpush1.msra.mxu0 %v365
        %367 = vmatprep.subr.mxu0 0.0
        %v368 = vand.u32 %v214, 4294901760
        %v369 = vsub.f32 %v214, %v368
        %v370 = vand.u32 %v369, 4294901760
        %v371 = vsub.f32 %v369, %v370
        %v372 = vand.u32 %v371, 4294901760
        %373 = vmatpush1.msra.mxu0 %v372
        %374 = vmatprep.subr.mxu0 0.0
        %v375 = vand.u32 %v215, 4294901760
        %v376 = vsub.f32 %v215, %v375
        %v377 = vand.u32 %v376, 4294901760
        %v378 = vsub.f32 %v376, %v377
        %v379 = vand.u32 %v378, 4294901760
        %380 = vmatpush1.msra.mxu0 %v379
        %381 = vmatprep.subr.mxu0 0.0
        %v382 = vand.u32 %v216, 4294901760
        %v383 = vsub.f32 %v216, %v382
        %v384 = vand.u32 %v383, 4294901760
        %v385 = vsub.f32 %v383, %v384
        %v386 = vand.u32 %v385, 4294901760
        %387 = vmatpush1.msra.mxu0 %v386
        %388 = vmatprep.subr.mxu0 0.0
        %v389 = vand.u32 %v217, 4294901760
        %v390 = vsub.f32 %v217, %v389
        %v391 = vand.u32 %v390, 4294901760
        %v392 = vsub.f32 %v390, %v391
        %v393 = vand.u32 %v392, 4294901760
        %394 = vmatpush1.msra.mxu0 %v393
        %395 = vmatprep.subr.mxu0 0.0
        %v396 = vand.u32 %v218, 4294901760
        %v397 = vsub.f32 %v218, %v396
        %v398 = vand.u32 %v397, 4294901760
        %v399 = vsub.f32 %v397, %v398
        %v400 = vand.u32 %v399, 4294901760
        %401 = vmatpush1.msra.mxu0 %v400
        %402 = vmatprep.subr.mxu0 0.0
        %v403 = vand.u32 %v219, 4294901760
        %v404 = vsub.f32 %v219, %v403
        %v405 = vand.u32 %v404, 4294901760
        %v406 = vsub.f32 %v404, %v405
        %v407 = vand.u32 %v406, 4294901760
        %408 = vmatpush1.msra.mxu0 %v407
        %409 = vmatprep.subr.mxu0 0.0
        %v410 = vand.u32 %v220, 4294901760
        %v411 = vsub.f32 %v220, %v410
        %v412 = vand.u32 %v411, 4294901760
        %v413 = vsub.f32 %v411, %v412
        %v414 = vand.u32 %v413, 4294901760
        %415 = vmatpush1.msra.mxu0 %v414
        %416 = vmatprep.subr.mxu0 0.0
        %v417 = vand.u32 %v221, 4294901760
        %v418 = vsub.f32 %v221, %v417
        %v419 = vand.u32 %v418, 4294901760
        %v420 = vsub.f32 %v418, %v419
        %v421 = vand.u32 %v420, 4294901760
        %422 = vmatpush1.msra.mxu0 %v421
        %423 = vmatprep.subr.mxu0 0.0
        %v424 = vand.u32 %v222, 4294901760
        %v425 = vsub.f32 %v222, %v424
        %v426 = vand.u32 %v425, 4294901760
        %v427 = vsub.f32 %v425, %v426
        %v428 = vand.u32 %v427, 4294901760
        %429 = vmatpush1.msra.mxu0 %v428
        %430 = vmatprep.subr.mxu0 0.0
        %v431 = vand.u32 %v223, 4294901760
        %v432 = vsub.f32 %v223, %v431
        %v433 = vand.u32 %v432, 4294901760
        %v434 = vsub.f32 %v432, %v433
        %v435 = vand.u32 %v434, 4294901760
        %436 = vmatpush1.msra.mxu0 %v435
        %437 = vmatprep.subr.mxu0 0.0
        %438 = vmatpush1.msra.mxu0 0.0
        %439 = vmatprep.subr.mxu0 0.0
        %440 = vmatpush1.msra.mxu0 0.0
        %441 = vmatprep.subr.mxu0 0.0
        %442 = vmatpush1.msra.mxu0 0.0
        %443 = vmatprep.subr.mxu0 0.0
        %444 = vmatpush1.msra.mxu0 0.0
        %445 = vmatprep.subr.mxu0 0.0
        %446 = vmatpush1.msra.mxu0 0.0
        %447 = vmatprep.subr.mxu0 0.0
        %448 = vmatpush1.msra.mxu0 0.0
        %449 = vmatprep.subr.mxu0 0.0
        %450 = vmatpush1.msra.mxu0 0.0
        %451 = vmatprep.subr.mxu0 0.0
        %452 = vmatpush1.msra.mxu0 0.0
        %453 = vmatprep.subr.mxu0 0.0
        %454 = vmatpush1.msra.mxu0 0.0
        %455 = vmatprep.subr.mxu0 0.0
        %456 = vmatpush1.msra.mxu0 0.0
        %457 = vmatprep.subr.mxu0 0.0
        %458 = vmatpush1.msra.mxu0 0.0
        %459 = vmatprep.subr.mxu0 0.0
        %460 = vmatpush1.msra.mxu0 0.0
        %461 = vmatprep.subr.mxu0 0.0
        %462 = vmatpush1.msra.mxu0 0.0
        %463 = vmatprep.subr.mxu0 0.0
        %464 = vmatpush1.msra.mxu0 0.0
        %465 = vmatprep.subr.mxu0 0.0
        %466 = vmatpush1.msra.mxu0 0.0
        %467 = vmatprep.subr.mxu0 0.0
        %468 = vmatpush1.msra.mxu0 0.0
        %469 = vmatprep.mubr.f32.mxu0 0.0
        %v470 = vand.u32 %v206, 4294901760
        %471 = vmatmul.mubr.f32.gmra.mrb[0].mxu0 %v470
        %v472 = vpop.f32.mrb[0].mxu0
        %v473 = vadd.f32 %v312, %v472
        %v474 = vpop.f32.mrb[0].mxu0
        %475 = vmatprep.mubr.f32.mxu0 0.0
        %v476 = vand.u32 %v207, 4294901760
        %477 = vmatmul.mubr.f32.gmra.mrb[0].mxu0 %v476
        %v478 = vpop.f32.mrb[0].mxu0
        %v479 = vadd.f32 %v322, %v478
        %v480 = vpop.f32.mrb[0].mxu0
        %481 = vdwg.mxu0
        %482 = vmatprep.subr.mxu0 0.0
        %v483 = vand.u32 %v208, 4294901760
        %v484 = vsub.f32 %v208, %v483
        %485 = vmatpush1.msra.mxu0 %v484
        %486 = vmatprep.subr.mxu0 0.0
        %v487 = vand.u32 %v209, 4294901760
        %v488 = vsub.f32 %v209, %v487
        %489 = vmatpush1.msra.mxu0 %v488
        %490 = vmatprep.subr.mxu0 0.0
        %v491 = vand.u32 %v210, 4294901760
        %v492 = vsub.f32 %v210, %v491
        %493 = vmatpush1.msra.mxu0 %v492
        %494 = vmatprep.subr.mxu0 0.0
        %v495 = vand.u32 %v211, 4294901760
        %v496 = vsub.f32 %v211, %v495
        %497 = vmatpush1.msra.mxu0 %v496
        %498 = vmatprep.subr.mxu0 0.0
        %v499 = vand.u32 %v212, 4294901760
        %v500 = vsub.f32 %v212, %v499
        %501 = vmatpush1.msra.mxu0 %v500
        %502 = vmatprep.subr.mxu0 0.0
        %v503 = vand.u32 %v213, 4294901760
        %v504 = vsub.f32 %v213, %v503
        %505 = vmatpush1.msra.mxu0 %v504
        %506 = vmatprep.subr.mxu0 0.0
        %v507 = vand.u32 %v214, 4294901760
        %v508 = vsub.f32 %v214, %v507
        %509 = vmatpush1.msra.mxu0 %v508
        %510 = vmatprep.subr.mxu0 0.0
        %v511 = vand.u32 %v215, 4294901760
        %v512 = vsub.f32 %v215, %v511
        %513 = vmatpush1.msra.mxu0 %v512
        %514 = vmatprep.subr.mxu0 0.0
        %v515 = vand.u32 %v216, 4294901760
        %v516 = vsub.f32 %v216, %v515
        %517 = vmatpush1.msra.mxu0 %v516
        %518 = vmatprep.subr.mxu0 0.0
        %v519 = vand.u32 %v217, 4294901760
        %v520 = vsub.f32 %v217, %v519
        %521 = vmatpush1.msra.mxu0 %v520
        %522 = vmatprep.subr.mxu0 0.0
        %v523 = vand.u32 %v218, 4294901760
        %v524 = vsub.f32 %v218, %v523
        %525 = vmatpush1.msra.mxu0 %v524
        %526 = vmatprep.subr.mxu0 0.0
        %v527 = vand.u32 %v219, 4294901760
        %v528 = vsub.f32 %v219, %v527
        %529 = vmatpush1.msra.mxu0 %v528
        %530 = vmatprep.subr.mxu0 0.0
        %v531 = vand.u32 %v220, 4294901760
        %v532 = vsub.f32 %v220, %v531
        %533 = vmatpush1.msra.mxu0 %v532
        %534 = vmatprep.subr.mxu0 0.0
        %v535 = vand.u32 %v221, 4294901760
        %v536 = vsub.f32 %v221, %v535
        %537 = vmatpush1.msra.mxu0 %v536
        %538 = vmatprep.subr.mxu0 0.0
        %v539 = vand.u32 %v222, 4294901760
        %v540 = vsub.f32 %v222, %v539
        %541 = vmatpush1.msra.mxu0 %v540
        %542 = vmatprep.subr.mxu0 0.0
        %v543 = vand.u32 %v223, 4294901760
        %v544 = vsub.f32 %v223, %v543
        %545 = vmatpush1.msra.mxu0 %v544
        %546 = vmatprep.subr.mxu0 0.0
        %547 = vmatpush1.msra.mxu0 0.0
        %548 = vmatprep.subr.mxu0 0.0
        %549 = vmatpush1.msra.mxu0 0.0
        %550 = vmatprep.subr.mxu0 0.0
        %551 = vmatpush1.msra.mxu0 0.0
        %552 = vmatprep.subr.mxu0 0.0
        %553 = vmatpush1.msra.mxu0 0.0
        %554 = vmatprep.subr.mxu0 0.0
        %555 = vmatpush1.msra.mxu0 0.0
        %556 = vmatprep.subr.mxu0 0.0
        %557 = vmatpush1.msra.mxu0 0.0
        %558 = vmatprep.subr.mxu0 0.0
        %559 = vmatpush1.msra.mxu0 0.0
        %560 = vmatprep.subr.mxu0 0.0
        %561 = vmatpush1.msra.mxu0 0.0
        %562 = vmatprep.subr.mxu0 0.0
        %563 = vmatpush1.msra.mxu0 0.0
        %564 = vmatprep.subr.mxu0 0.0
        %565 = vmatpush1.msra.mxu0 0.0
        %566 = vmatprep.subr.mxu0 0.0
        %567 = vmatpush1.msra.mxu0 0.0
        %568 = vmatprep.subr.mxu0 0.0
        %569 = vmatpush1.msra.mxu0 0.0
        %570 = vmatprep.subr.mxu0 0.0
        %571 = vmatpush1.msra.mxu0 0.0
        %572 = vmatprep.subr.mxu0 0.0
        %573 = vmatpush1.msra.mxu0 0.0
        %574 = vmatprep.subr.mxu0 0.0
        %575 = vmatpush1.msra.mxu0 0.0
        %576 = vmatprep.subr.mxu0 0.0
        %577 = vmatpush1.msra.mxu0 0.0
        %578 = vmatprep.mubr.f32.mxu0 0.0
        %v579 = vand.u32 %v206, 4294901760
        %v580 = vsub.f32 %v206, %v579
        %581 = vmatmul.mubr.f32.gmra.mrb[0].mxu0 %v580
        %v582 = vpop.f32.mrb[0].mxu0
        %v583 = vadd.f32 %v473, %v582
        %v584 = vpop.f32.mrb[0].mxu0
        %585 = vmatprep.mubr.f32.mxu0 0.0
        %v586 = vand.u32 %v207, 4294901760
        %v587 = vsub.f32 %v207, %v586
        %588 = vmatmul.mubr.f32.gmra.mrb[0].mxu0 %v587
        %v589 = vpop.f32.mrb[0].mxu0
        %v590 = vadd.f32 %v479, %v589
        %v591 = vpop.f32.mrb[0].mxu0
        %592 = vdwg.mxu0
        %593 = vmatprep.subr.mxu0 0.0
        %v594 = vand.u32 %v208, 4294901760
        %595 = vmatpush1.msra.mxu0 %v594
        %596 = vmatprep.subr.mxu0 0.0
        %v597 = vand.u32 %v209, 4294901760
        %598 = vmatpush1.msra.mxu0 %v597
        %599 = vmatprep.subr.mxu0 0.0
        %v600 = vand.u32 %v210, 4294901760
        %601 = vmatpush1.msra.mxu0 %v600
        %602 = vmatprep.subr.mxu0 0.0
        %v603 = vand.u32 %v211, 4294901760
        %604 = vmatpush1.msra.mxu0 %v603
        %605 = vmatprep.subr.mxu0 0.0
        %v606 = vand.u32 %v212, 4294901760
        %607 = vmatpush1.msra.mxu0 %v606
        %608 = vmatprep.subr.mxu0 0.0
        %v609 = vand.u32 %v213, 4294901760
        %610 = vmatpush1.msra.mxu0 %v609
        %611 = vmatprep.subr.mxu0 0.0
        %v612 = vand.u32 %v214, 4294901760
        %613 = vmatpush1.msra.mxu0 %v612
        %614 = vmatprep.subr.mxu0 0.0
        %v615 = vand.u32 %v215, 4294901760
        %616 = vmatpush1.msra.mxu0 %v615
        %617 = vmatprep.subr.mxu0 0.0
        %v618 = vand.u32 %v216, 4294901760
        %619 = vmatpush1.msra.mxu0 %v618
        %620 = vmatprep.subr.mxu0 0.0
        %v621 = vand.u32 %v217, 4294901760
        %622 = vmatpush1.msra.mxu0 %v621
        %623 = vmatprep.subr.mxu0 0.0
        %v624 = vand.u32 %v218, 4294901760
        %625 = vmatpush1.msra.mxu0 %v624
        %626 = vmatprep.subr.mxu0 0.0
        %v627 = vand.u32 %v219, 4294901760
        %628 = vmatpush1.msra.mxu0 %v627
        %629 = vmatprep.subr.mxu0 0.0
        %v630 = vand.u32 %v220, 4294901760
        %631 = vmatpush1.msra.mxu0 %v630
        %632 = vmatprep.subr.mxu0 0.0
        %v633 = vand.u32 %v221, 4294901760
        %634 = vmatpush1.msra.mxu0 %v633
        %635 = vmatprep.subr.mxu0 0.0
        %v636 = vand.u32 %v222, 4294901760
        %637 = vmatpush1.msra.mxu0 %v636
        %638 = vmatprep.subr.mxu0 0.0
        %v639 = vand.u32 %v223, 4294901760
        %640 = vmatpush1.msra.mxu0 %v639
        %641 = vmatprep.subr.mxu0 0.0
        %642 = vmatpush1.msra.mxu0 0.0
        %643 = vmatprep.subr.mxu0 0.0
        %644 = vmatpush1.msra.mxu0 0.0
        %645 = vmatprep.subr.mxu0 0.0
        %646 = vmatpush1.msra.mxu0 0.0
        %647 = vmatprep.subr.mxu0 0.0
        %648 = vmatpush1.msra.mxu0 0.0
        %649 = vmatprep.subr.mxu0 0.0
        %650 = vmatpush1.msra.mxu0 0.0
        %651 = vmatprep.subr.mxu0 0.0
        %652 = vmatpush1.msra.mxu0 0.0
        %653 = vmatprep.subr.mxu0 0.0
        %654 = vmatpush1.msra.mxu0 0.0
        %655 = vmatprep.subr.mxu0 0.0
        %656 = vmatpush1.msra.mxu0 0.0
        %657 = vmatprep.subr.mxu0 0.0
        %658 = vmatpush1.msra.mxu0 0.0
        %659 = vmatprep.subr.mxu0 0.0
        %660 = vmatpush1.msra.mxu0 0.0
        %661 = vmatprep.subr.mxu0 0.0
        %662 = vmatpush1.msra.mxu0 0.0
        %663 = vmatprep.subr.mxu0 0.0
        %664 = vmatpush1.msra.mxu0 0.0
        %665 = vmatprep.subr.mxu0 0.0
        %666 = vmatpush1.msra.mxu0 0.0
        %667 = vmatprep.subr.mxu0 0.0
        %668 = vmatpush1.msra.mxu0 0.0
        %669 = vmatprep.subr.mxu0 0.0
        %670 = vmatpush1.msra.mxu0 0.0
        %671 = vmatprep.subr.mxu0 0.0
        %672 = vmatpush1.msra.mxu0 0.0
        %673 = vmatprep.mubr.f32.mxu0 0.0
        %v674 = vand.u32 %v206, 4294901760
        %v675 = vsub.f32 %v206, %v674
        %v676 = vand.u32 %v675, 4294901760
        %677 = vmatmul.mubr.f32.gmra.mrb[0].mxu0 %v676
        %v678 = vpop.f32.mrb[0].mxu0
        %v679 = vadd.f32 %v583, %v678
        %v680 = vpop.f32.mrb[0].mxu0
        %681 = vmatprep.mubr.f32.mxu0 0.0
        %v682 = vand.u32 %v207, 4294901760
        %v683 = vsub.f32 %v207, %v682
        %v684 = vand.u32 %v683, 4294901760
        %685 = vmatmul.mubr.f32.gmra.mrb[0].mxu0 %v684
        %v686 = vpop.f32.mrb[0].mxu0
        %v687 = vadd.f32 %v590, %v686
        %v688 = vpop.f32.mrb[0].mxu0
        %689 = vdwg.mxu0
        %690 = vmatprep.subr.mxu0 0.0
        %v691 = vand.u32 %v208, 4294901760
        %v692 = vsub.f32 %v208, %v691
        %v693 = vand.u32 %v692, 4294901760
        %694 = vmatpush1.msra.mxu0 %v693
        %695 = vmatprep.subr.mxu0 0.0
        %v696 = vand.u32 %v209, 4294901760
        %v697 = vsub.f32 %v209, %v696
        %v698 = vand.u32 %v697, 4294901760
        %699 = vmatpush1.msra.mxu0 %v698
        %700 = vmatprep.subr.mxu0 0.0
        %v701 = vand.u32 %v210, 4294901760
        %v702 = vsub.f32 %v210, %v701
        %v703 = vand.u32 %v702, 4294901760
        %704 = vmatpush1.msra.mxu0 %v703
        %705 = vmatprep.subr.mxu0 0.0
        %v706 = vand.u32 %v211, 4294901760
        %v707 = vsub.f32 %v211, %v706
        %v708 = vand.u32 %v707, 4294901760
        %709 = vmatpush1.msra.mxu0 %v708
        %710 = vmatprep.subr.mxu0 0.0
        %v711 = vand.u32 %v212, 4294901760
        %v712 = vsub.f32 %v212, %v711
        %v713 = vand.u32 %v712, 4294901760
        %714 = vmatpush1.msra.mxu0 %v713
        %715 = vmatprep.subr.mxu0 0.0
        %v716 = vand.u32 %v213, 4294901760
        %v717 = vsub.f32 %v213, %v716
        %v718 = vand.u32 %v717, 4294901760
        %719 = vmatpush1.msra.mxu0 %v718
        %720 = vmatprep.subr.mxu0 0.0
        %v721 = vand.u32 %v214, 4294901760
        %v722 = vsub.f32 %v214, %v721
        %v723 = vand.u32 %v722, 4294901760
        %724 = vmatpush1.msra.mxu0 %v723
        %725 = vmatprep.subr.mxu0 0.0
        %v726 = vand.u32 %v215, 4294901760
        %v727 = vsub.f32 %v215, %v726
        %v728 = vand.u32 %v727, 4294901760
        %729 = vmatpush1.msra.mxu0 %v728
        %730 = vmatprep.subr.mxu0 0.0
        %v731 = vand.u32 %v216, 4294901760
        %v732 = vsub.f32 %v216, %v731
        %v733 = vand.u32 %v732, 4294901760
        %734 = vmatpush1.msra.mxu0 %v733
        %735 = vmatprep.subr.mxu0 0.0
        %v736 = vand.u32 %v217, 4294901760
        %v737 = vsub.f32 %v217, %v736
        %v738 = vand.u32 %v737, 4294901760
        %739 = vmatpush1.msra.mxu0 %v738
        %740 = vmatprep.subr.mxu0 0.0
        %v741 = vand.u32 %v218, 4294901760
        %v742 = vsub.f32 %v218, %v741
        %v743 = vand.u32 %v742, 4294901760
        %744 = vmatpush1.msra.mxu0 %v743
        %745 = vmatprep.subr.mxu0 0.0
        %v746 = vand.u32 %v219, 4294901760
        %v747 = vsub.f32 %v219, %v746
        %v748 = vand.u32 %v747, 4294901760
        %749 = vmatpush1.msra.mxu0 %v748
        %750 = vmatprep.subr.mxu0 0.0
        %v751 = vand.u32 %v220, 4294901760
        %v752 = vsub.f32 %v220, %v751
        %v753 = vand.u32 %v752, 4294901760
        %754 = vmatpush1.msra.mxu0 %v753
        %755 = vmatprep.subr.mxu0 0.0
        %v756 = vand.u32 %v221, 4294901760
        %v757 = vsub.f32 %v221, %v756
        %v758 = vand.u32 %v757, 4294901760
        %759 = vmatpush1.msra.mxu0 %v758
        %760 = vmatprep.subr.mxu0 0.0
        %v761 = vand.u32 %v222, 4294901760
        %v762 = vsub.f32 %v222, %v761
        %v763 = vand.u32 %v762, 4294901760
        %764 = vmatpush1.msra.mxu0 %v763
        %765 = vmatprep.subr.mxu0 0.0
        %v766 = vand.u32 %v223, 4294901760
        %v767 = vsub.f32 %v223, %v766
        %v768 = vand.u32 %v767, 4294901760
        %769 = vmatpush1.msra.mxu0 %v768
        %770 = vmatprep.subr.mxu0 0.0
        %771 = vmatpush1.msra.mxu0 0.0
        %772 = vmatprep.subr.mxu0 0.0
        %773 = vmatpush1.msra.mxu0 0.0
        %774 = vmatprep.subr.mxu0 0.0
        %775 = vmatpush1.msra.mxu0 0.0
        %776 = vmatprep.subr.mxu0 0.0
        %777 = vmatpush1.msra.mxu0 0.0
        %778 = vmatprep.subr.mxu0 0.0
        %779 = vmatpush1.msra.mxu0 0.0
        %780 = vmatprep.subr.mxu0 0.0
        %781 = vmatpush1.msra.mxu0 0.0
        %782 = vmatprep.subr.mxu0 0.0
        %783 = vmatpush1.msra.mxu0 0.0
        %784 = vmatprep.subr.mxu0 0.0
        %785 = vmatpush1.msra.mxu0 0.0
        %786 = vmatprep.subr.mxu0 0.0
        %787 = vmatpush1.msra.mxu0 0.0
        %788 = vmatprep.subr.mxu0 0.0
        %789 = vmatpush1.msra.mxu0 0.0
        %790 = vmatprep.subr.mxu0 0.0
        %791 = vmatpush1.msra.mxu0 0.0
        %792 = vmatprep.subr.mxu0 0.0
        %793 = vmatpush1.msra.mxu0 0.0
        %794 = vmatprep.subr.mxu0 0.0
        %795 = vmatpush1.msra.mxu0 0.0
        %796 = vmatprep.subr.mxu0 0.0
        %797 = vmatpush1.msra.mxu0 0.0
        %798 = vmatprep.subr.mxu0 0.0
        %799 = vmatpush1.msra.mxu0 0.0
        %800 = vmatprep.subr.mxu0 0.0
        %801 = vmatpush1.msra.mxu0 0.0
        %802 = vmatprep.mubr.f32.mxu0 0.0
        %v803 = vand.u32 %v206, 4294901760
        %804 = vmatmul.mubr.f32.gmra.mrb[0].mxu0 %v803
        %v805 = vpop.f32.mrb[0].mxu0
        %v806 = vadd.f32 %v679, %v805
        %v807 = vpop.f32.mrb[0].mxu0
        %808 = vmatprep.mubr.f32.mxu0 0.0
        %v809 = vand.u32 %v207, 4294901760
        %810 = vmatmul.mubr.f32.gmra.mrb[0].mxu0 %v809
        %v811 = vpop.f32.mrb[0].mxu0
        %v812 = vadd.f32 %v687, %v811
        %v813 = vpop.f32.mrb[0].mxu0
        %814 = vdwg.mxu0
        %815 = vmatprep.subr.mxu0 0.0
        %v816 = vand.u32 %v208, 4294901760
        %817 = vmatpush1.msra.mxu0 %v816
        %818 = vmatprep.subr.mxu0 0.0
        %v819 = vand.u32 %v209, 4294901760
        %820 = vmatpush1.msra.mxu0 %v819
        %821 = vmatprep.subr.mxu0 0.0
        %v822 = vand.u32 %v210, 4294901760
        %823 = vmatpush1.msra.mxu0 %v822
        %824 = vmatprep.subr.mxu0 0.0
        %v825 = vand.u32 %v211, 4294901760
        %826 = vmatpush1.msra.mxu0 %v825
        %827 = vmatprep.subr.mxu0 0.0
        %v828 = vand.u32 %v212, 4294901760
        %829 = vmatpush1.msra.mxu0 %v828
        %830 = vmatprep.subr.mxu0 0.0
        %v831 = vand.u32 %v213, 4294901760
        %832 = vmatpush1.msra.mxu0 %v831
        %833 = vmatprep.subr.mxu0 0.0
        %v834 = vand.u32 %v214, 4294901760
        %835 = vmatpush1.msra.mxu0 %v834
        %836 = vmatprep.subr.mxu0 0.0
        %v837 = vand.u32 %v215, 4294901760
        %838 = vmatpush1.msra.mxu0 %v837
        %839 = vmatprep.subr.mxu0 0.0
        %v840 = vand.u32 %v216, 4294901760
        %841 = vmatpush1.msra.mxu0 %v840
        %842 = vmatprep.subr.mxu0 0.0
        %v843 = vand.u32 %v217, 4294901760
        %844 = vmatpush1.msra.mxu0 %v843
        %845 = vmatprep.subr.mxu0 0.0
        %v846 = vand.u32 %v218, 4294901760
        %847 = vmatpush1.msra.mxu0 %v846
        %848 = vmatprep.subr.mxu0 0.0
        %v849 = vand.u32 %v219, 4294901760
        %850 = vmatpush1.msra.mxu0 %v849
        %851 = vmatprep.subr.mxu0 0.0
        %v852 = vand.u32 %v220, 4294901760
        %853 = vmatpush1.msra.mxu0 %v852
        %854 = vmatprep.subr.mxu0 0.0
        %v855 = vand.u32 %v221, 4294901760
        %856 = vmatpush1.msra.mxu0 %v855
        %857 = vmatprep.subr.mxu0 0.0
        %v858 = vand.u32 %v222, 4294901760
        %859 = vmatpush1.msra.mxu0 %v858
        %860 = vmatprep.subr.mxu0 0.0
        %v861 = vand.u32 %v223, 4294901760
        %862 = vmatpush1.msra.mxu0 %v861
        %863 = vmatprep.subr.mxu0 0.0
        %864 = vmatpush1.msra.mxu0 0.0
        %865 = vmatprep.subr.mxu0 0.0
        %866 = vmatpush1.msra.mxu0 0.0
        %867 = vmatprep.subr.mxu0 0.0
        %868 = vmatpush1.msra.mxu0 0.0
        %869 = vmatprep.subr.mxu0 0.0
        %870 = vmatpush1.msra.mxu0 0.0
        %871 = vmatprep.subr.mxu0 0.0
        %872 = vmatpush1.msra.mxu0 0.0
        %873 = vmatprep.subr.mxu0 0.0
        %874 = vmatpush1.msra.mxu0 0.0
        %875 = vmatprep.subr.mxu0 0.0
        %876 = vmatpush1.msra.mxu0 0.0
        %877 = vmatprep.subr.mxu0 0.0
        %878 = vmatpush1.msra.mxu0 0.0
        %879 = vmatprep.subr.mxu0 0.0
        %880 = vmatpush1.msra.mxu0 0.0
        %881 = vmatprep.subr.mxu0 0.0
        %882 = vmatpush1.msra.mxu0 0.0
        %883 = vmatprep.subr.mxu0 0.0
        %884 = vmatpush1.msra.mxu0 0.0
        %885 = vmatprep.subr.mxu0 0.0
        %886 = vmatpush1.msra.mxu0 0.0
        %887 = vmatprep.subr.mxu0 0.0
        %888 = vmatpush1.msra.mxu0 0.0
        %889 = vmatprep.subr.mxu0 0.0
        %890 = vmatpush1.msra.mxu0 0.0
        %891 = vmatprep.subr.mxu0 0.0
        %892 = vmatpush1.msra.mxu0 0.0
        %893 = vmatprep.subr.mxu0 0.0
        %894 = vmatpush1.msra.mxu0 0.0
        %895 = vmatprep.mubr.f32.mxu0 0.0
        %v896 = vand.u32 %v206, 4294901760
        %897 = vmatmul.mubr.f32.gmra.mrb[0].mxu0 %v896
        %v898 = vpop.f32.mrb[0].mxu0
        %v899 = vadd.f32 %v806, %v898
        %v900 = vpop.f32.mrb[0].mxu0
        %901 = vmatprep.mubr.f32.mxu0 0.0
        %v902 = vand.u32 %v207, 4294901760
        %903 = vmatmul.mubr.f32.gmra.mrb[0].mxu0 %v902
        %v904 = vpop.f32.mrb[0].mxu0
        %v905 = vadd.f32 %v812, %v904
        %v906 = vpop.f32.mrb[0].mxu0
        %907 = vdwg.mxu0
        %v908 = vmul.f32 %v899, 0.03125
        %v909 = vmul.f32 %v905, 0.03125
        %v910 = vsub.f32 %v206, %v908
        %v911 = vsub.f32 %v207, %v909
        %v912 = vmul.f32 %v910, %v910
        %v913 = vmul.f32 %v911, %v911
        %914 = vmatprep.subr.mxu0 0.0
        %v915 = vand.u32 %v208, 4294901760
        %916 = vmatpush1.msra.mxu0 %v915
        %917 = vmatprep.subr.mxu0 0.0
        %v918 = vand.u32 %v209, 4294901760
        %919 = vmatpush1.msra.mxu0 %v918
        %920 = vmatprep.subr.mxu0 0.0
        %v921 = vand.u32 %v210, 4294901760
        %922 = vmatpush1.msra.mxu0 %v921
        %923 = vmatprep.subr.mxu0 0.0
        %v924 = vand.u32 %v211, 4294901760
        %925 = vmatpush1.msra.mxu0 %v924
        %926 = vmatprep.subr.mxu0 0.0
        %v927 = vand.u32 %v212, 4294901760
        %928 = vmatpush1.msra.mxu0 %v927
        %929 = vmatprep.subr.mxu0 0.0
        %v930 = vand.u32 %v213, 4294901760
        %931 = vmatpush1.msra.mxu0 %v930
        %932 = vmatprep.subr.mxu0 0.0
        %v933 = vand.u32 %v214, 4294901760
        %934 = vmatpush1.msra.mxu0 %v933
        %935 = vmatprep.subr.mxu0 0.0
        %v936 = vand.u32 %v215, 4294901760
        %937 = vmatpush1.msra.mxu0 %v936
        %938 = vmatprep.subr.mxu0 0.0
        %v939 = vand.u32 %v216, 4294901760
        %940 = vmatpush1.msra.mxu0 %v939
        %941 = vmatprep.subr.mxu0 0.0
        %v942 = vand.u32 %v217, 4294901760
        %943 = vmatpush1.msra.mxu0 %v942
        %944 = vmatprep.subr.mxu0 0.0
        %v945 = vand.u32 %v218, 4294901760
        %946 = vmatpush1.msra.mxu0 %v945
        %947 = vmatprep.subr.mxu0 0.0
        %v948 = vand.u32 %v219, 4294901760
        %949 = vmatpush1.msra.mxu0 %v948
        %950 = vmatprep.subr.mxu0 0.0
        %v951 = vand.u32 %v220, 4294901760
        %952 = vmatpush1.msra.mxu0 %v951
        %953 = vmatprep.subr.mxu0 0.0
        %v954 = vand.u32 %v221, 4294901760
        %955 = vmatpush1.msra.mxu0 %v954
        %956 = vmatprep.subr.mxu0 0.0
        %v957 = vand.u32 %v222, 4294901760
        %958 = vmatpush1.msra.mxu0 %v957
        %959 = vmatprep.subr.mxu0 0.0
        %v960 = vand.u32 %v223, 4294901760
        %961 = vmatpush1.msra.mxu0 %v960
        %962 = vmatprep.subr.mxu0 0.0
        %963 = vmatpush1.msra.mxu0 0.0
        %964 = vmatprep.subr.mxu0 0.0
        %965 = vmatpush1.msra.mxu0 0.0
        %966 = vmatprep.subr.mxu0 0.0
        %967 = vmatpush1.msra.mxu0 0.0
        %968 = vmatprep.subr.mxu0 0.0
        %969 = vmatpush1.msra.mxu0 0.0
        %970 = vmatprep.subr.mxu0 0.0
        %971 = vmatpush1.msra.mxu0 0.0
        %972 = vmatprep.subr.mxu0 0.0
        %973 = vmatpush1.msra.mxu0 0.0
        %974 = vmatprep.subr.mxu0 0.0
        %975 = vmatpush1.msra.mxu0 0.0
        %976 = vmatprep.subr.mxu0 0.0
        %977 = vmatpush1.msra.mxu0 0.0
        %978 = vmatprep.subr.mxu0 0.0
        %979 = vmatpush1.msra.mxu0 0.0
        %980 = vmatprep.subr.mxu0 0.0
        %981 = vmatpush1.msra.mxu0 0.0
        %982 = vmatprep.subr.mxu0 0.0
        %983 = vmatpush1.msra.mxu0 0.0
        %984 = vmatprep.subr.mxu0 0.0
        %985 = vmatpush1.msra.mxu0 0.0
        %986 = vmatprep.subr.mxu0 0.0
        %987 = vmatpush1.msra.mxu0 0.0
        %988 = vmatprep.subr.mxu0 0.0
        %989 = vmatpush1.msra.mxu0 0.0
        %990 = vmatprep.subr.mxu0 0.0
        %991 = vmatpush1.msra.mxu0 0.0
        %992 = vmatprep.subr.mxu0 0.0
        %993 = vmatpush1.msra.mxu0 0.0
        %994 = vmatprep.mubr.f32.mxu0 0.0
        %v995 = vand.u32 %v912, 4294901760
        %v996 = vsub.f32 %v912, %v995
        %v997 = vand.u32 %v996, 4294901760
        %v998 = vsub.f32 %v996, %v997
        %v999 = vand.u32 %v998, 4294901760
        %1000 = vmatmul.mubr.f32.gmra.mrb[0].mxu0 %v999
        %v1001 = vpop.f32.mrb[0].mxu0
        %v1002 = vadd.f32 0.0, %v1001
        %v1003 = vpop.f32.mrb[0].mxu0
        %1004 = vmatprep.mubr.f32.mxu0 0.0
        %v1005 = vand.u32 %v913, 4294901760
        %v1006 = vsub.f32 %v913, %v1005
        %v1007 = vand.u32 %v1006, 4294901760
        %v1008 = vsub.f32 %v1006, %v1007
        %v1009 = vand.u32 %v1008, 4294901760
        %1010 = vmatmul.mubr.f32.gmra.mrb[0].mxu0 %v1009
        %v1011 = vpop.f32.mrb[0].mxu0
        %v1012 = vadd.f32 0.0, %v1011
        %v1013 = vpop.f32.mrb[0].mxu0
        %1014 = vdwg.mxu0
        %1015 = vmatprep.subr.mxu0 0.0
        %v1016 = vand.u32 %v208, 4294901760
        %v1017 = vsub.f32 %v208, %v1016
        %v1018 = vand.u32 %v1017, 4294901760
        %v1019 = vsub.f32 %v1017, %v1018
        %v1020 = vand.u32 %v1019, 4294901760
        %1021 = vmatpush1.msra.mxu0 %v1020
        %1022 = vmatprep.subr.mxu0 0.0
        %v1023 = vand.u32 %v209, 4294901760
        %v1024 = vsub.f32 %v209, %v1023
        %v1025 = vand.u32 %v1024, 4294901760
        %v1026 = vsub.f32 %v1024, %v1025
        %v1027 = vand.u32 %v1026, 4294901760
        %1028 = vmatpush1.msra.mxu0 %v1027
        %1029 = vmatprep.subr.mxu0 0.0
        %v1030 = vand.u32 %v210, 4294901760
        %v1031 = vsub.f32 %v210, %v1030
        %v1032 = vand.u32 %v1031, 4294901760
        %v1033 = vsub.f32 %v1031, %v1032
        %v1034 = vand.u32 %v1033, 4294901760
        %1035 = vmatpush1.msra.mxu0 %v1034
        %1036 = vmatprep.subr.mxu0 0.0
        %v1037 = vand.u32 %v211, 4294901760
        %v1038 = vsub.f32 %v211, %v1037
        %v1039 = vand.u32 %v1038, 4294901760
        %v1040 = vsub.f32 %v1038, %v1039
        %v1041 = vand.u32 %v1040, 4294901760
        %1042 = vmatpush1.msra.mxu0 %v1041
        %1043 = vmatprep.subr.mxu0 0.0
        %v1044 = vand.u32 %v212, 4294901760
        %v1045 = vsub.f32 %v212, %v1044
        %v1046 = vand.u32 %v1045, 4294901760
        %v1047 = vsub.f32 %v1045, %v1046
        %v1048 = vand.u32 %v1047, 4294901760
        %1049 = vmatpush1.msra.mxu0 %v1048
        %1050 = vmatprep.subr.mxu0 0.0
        %v1051 = vand.u32 %v213, 4294901760
        %v1052 = vsub.f32 %v213, %v1051
        %v1053 = vand.u32 %v1052, 4294901760
        %v1054 = vsub.f32 %v1052, %v1053
        %v1055 = vand.u32 %v1054, 4294901760
        %1056 = vmatpush1.msra.mxu0 %v1055
        %1057 = vmatprep.subr.mxu0 0.0
        %v1058 = vand.u32 %v214, 4294901760
        %v1059 = vsub.f32 %v214, %v1058
        %v1060 = vand.u32 %v1059, 4294901760
        %v1061 = vsub.f32 %v1059, %v1060
        %v1062 = vand.u32 %v1061, 4294901760
        %1063 = vmatpush1.msra.mxu0 %v1062
        %1064 = vmatprep.subr.mxu0 0.0
        %v1065 = vand.u32 %v215, 4294901760
        %v1066 = vsub.f32 %v215, %v1065
        %v1067 = vand.u32 %v1066, 4294901760
        %v1068 = vsub.f32 %v1066, %v1067
        %v1069 = vand.u32 %v1068, 4294901760
        %1070 = vmatpush1.msra.mxu0 %v1069
        %1071 = vmatprep.subr.mxu0 0.0
        %v1072 = vand.u32 %v216, 4294901760
        %v1073 = vsub.f32 %v216, %v1072
        %v1074 = vand.u32 %v1073, 4294901760
        %v1075 = vsub.f32 %v1073, %v1074
        %v1076 = vand.u32 %v1075, 4294901760
        %1077 = vmatpush1.msra.mxu0 %v1076
        %1078 = vmatprep.subr.mxu0 0.0
        %v1079 = vand.u32 %v217, 4294901760
        %v1080 = vsub.f32 %v217, %v1079
        %v1081 = vand.u32 %v1080, 4294901760
        %v1082 = vsub.f32 %v1080, %v1081
        %v1083 = vand.u32 %v1082, 4294901760
        %1084 = vmatpush1.msra.mxu0 %v1083
        %1085 = vmatprep.subr.mxu0 0.0
        %v1086 = vand.u32 %v218, 4294901760
        %v1087 = vsub.f32 %v218, %v1086
        %v1088 = vand.u32 %v1087, 4294901760
        %v1089 = vsub.f32 %v1087, %v1088
        %v1090 = vand.u32 %v1089, 4294901760
        %1091 = vmatpush1.msra.mxu0 %v1090
        %1092 = vmatprep.subr.mxu0 0.0
        %v1093 = vand.u32 %v219, 4294901760
        %v1094 = vsub.f32 %v219, %v1093
        %v1095 = vand.u32 %v1094, 4294901760
        %v1096 = vsub.f32 %v1094, %v1095
        %v1097 = vand.u32 %v1096, 4294901760
        %1098 = vmatpush1.msra.mxu0 %v1097
        %1099 = vmatprep.subr.mxu0 0.0
        %v1100 = vand.u32 %v220, 4294901760
        %v1101 = vsub.f32 %v220, %v1100
        %v1102 = vand.u32 %v1101, 4294901760
        %v1103 = vsub.f32 %v1101, %v1102
        %v1104 = vand.u32 %v1103, 4294901760
        %1105 = vmatpush1.msra.mxu0 %v1104
        %1106 = vmatprep.subr.mxu0 0.0
        %v1107 = vand.u32 %v221, 4294901760
        %v1108 = vsub.f32 %v221, %v1107
        %v1109 = vand.u32 %v1108, 4294901760
        %v1110 = vsub.f32 %v1108, %v1109
        %v1111 = vand.u32 %v1110, 4294901760
        %1112 = vmatpush1.msra.mxu0 %v1111
        %1113 = vmatprep.subr.mxu0 0.0
        %v1114 = vand.u32 %v222, 4294901760
        %v1115 = vsub.f32 %v222, %v1114
        %v1116 = vand.u32 %v1115, 4294901760
        %v1117 = vsub.f32 %v1115, %v1116
        %v1118 = vand.u32 %v1117, 4294901760
        %1119 = vmatpush1.msra.mxu0 %v1118
        %1120 = vmatprep.subr.mxu0 0.0
        %v1121 = vand.u32 %v223, 4294901760
        %v1122 = vsub.f32 %v223, %v1121
        %v1123 = vand.u32 %v1122, 4294901760
        %v1124 = vsub.f32 %v1122, %v1123
        %v1125 = vand.u32 %v1124, 4294901760
        %1126 = vmatpush1.msra.mxu0 %v1125
        %1127 = vmatprep.subr.mxu0 0.0
        %1128 = vmatpush1.msra.mxu0 0.0
        %1129 = vmatprep.subr.mxu0 0.0
        %1130 = vmatpush1.msra.mxu0 0.0
        %1131 = vmatprep.subr.mxu0 0.0
        %1132 = vmatpush1.msra.mxu0 0.0
        %1133 = vmatprep.subr.mxu0 0.0
        %1134 = vmatpush1.msra.mxu0 0.0
        %1135 = vmatprep.subr.mxu0 0.0
        %1136 = vmatpush1.msra.mxu0 0.0
        %1137 = vmatprep.subr.mxu0 0.0
        %1138 = vmatpush1.msra.mxu0 0.0
        %1139 = vmatprep.subr.mxu0 0.0
        %1140 = vmatpush1.msra.mxu0 0.0
        %1141 = vmatprep.subr.mxu0 0.0
        %1142 = vmatpush1.msra.mxu0 0.0
        %1143 = vmatprep.subr.mxu0 0.0
        %1144 = vmatpush1.msra.mxu0 0.0
        %1145 = vmatprep.subr.mxu0 0.0
        %1146 = vmatpush1.msra.mxu0 0.0
        %1147 = vmatprep.subr.mxu0 0.0
        %1148 = vmatpush1.msra.mxu0 0.0
        %1149 = vmatprep.subr.mxu0 0.0
        %1150 = vmatpush1.msra.mxu0 0.0
        %1151 = vmatprep.subr.mxu0 0.0
        %1152 = vmatpush1.msra.mxu0 0.0
        %1153 = vmatprep.subr.mxu0 0.0
        %1154 = vmatpush1.msra.mxu0 0.0
        %1155 = vmatprep.subr.mxu0 0.0
        %1156 = vmatpush1.msra.mxu0 0.0
        %1157 = vmatprep.subr.mxu0 0.0
        %1158 = vmatpush1.msra.mxu0 0.0
        %1159 = vmatprep.mubr.f32.mxu0 0.0
        %v1160 = vand.u32 %v912, 4294901760
        %1161 = vmatmul.mubr.f32.gmra.mrb[0].mxu0 %v1160
        %v1162 = vpop.f32.mrb[0].mxu0
        %v1163 = vadd.f32 %v1002, %v1162
        %v1164 = vpop.f32.mrb[0].mxu0
        %1165 = vmatprep.mubr.f32.mxu0 0.0
        %v1166 = vand.u32 %v913, 4294901760
        %1167 = vmatmul.mubr.f32.gmra.mrb[0].mxu0 %v1166
        %v1168 = vpop.f32.mrb[0].mxu0
        %v1169 = vadd.f32 %v1012, %v1168
        %v1170 = vpop.f32.mrb[0].mxu0
        %1171 = vdwg.mxu0
        %1172 = vmatprep.subr.mxu0 0.0
        %v1173 = vand.u32 %v208, 4294901760
        %v1174 = vsub.f32 %v208, %v1173
        %1175 = vmatpush1.msra.mxu0 %v1174
        %1176 = vmatprep.subr.mxu0 0.0
        %v1177 = vand.u32 %v209, 4294901760
        %v1178 = vsub.f32 %v209, %v1177
        %1179 = vmatpush1.msra.mxu0 %v1178
        %1180 = vmatprep.subr.mxu0 0.0
        %v1181 = vand.u32 %v210, 4294901760
        %v1182 = vsub.f32 %v210, %v1181
        %1183 = vmatpush1.msra.mxu0 %v1182
        %1184 = vmatprep.subr.mxu0 0.0
        %v1185 = vand.u32 %v211, 4294901760
        %v1186 = vsub.f32 %v211, %v1185
        %1187 = vmatpush1.msra.mxu0 %v1186
        %1188 = vmatprep.subr.mxu0 0.0
        %v1189 = vand.u32 %v212, 4294901760
        %v1190 = vsub.f32 %v212, %v1189
        %1191 = vmatpush1.msra.mxu0 %v1190
        %1192 = vmatprep.subr.mxu0 0.0
        %v1193 = vand.u32 %v213, 4294901760
        %v1194 = vsub.f32 %v213, %v1193
        %1195 = vmatpush1.msra.mxu0 %v1194
        %1196 = vmatprep.subr.mxu0 0.0
        %v1197 = vand.u32 %v214, 4294901760
        %v1198 = vsub.f32 %v214, %v1197
        %1199 = vmatpush1.msra.mxu0 %v1198
        %1200 = vmatprep.subr.mxu0 0.0
        %v1201 = vand.u32 %v215, 4294901760
        %v1202 = vsub.f32 %v215, %v1201
        %1203 = vmatpush1.msra.mxu0 %v1202
        %1204 = vmatprep.subr.mxu0 0.0
        %v1205 = vand.u32 %v216, 4294901760
        %v1206 = vsub.f32 %v216, %v1205
        %1207 = vmatpush1.msra.mxu0 %v1206
        %1208 = vmatprep.subr.mxu0 0.0
        %v1209 = vand.u32 %v217, 4294901760
        %v1210 = vsub.f32 %v217, %v1209
        %1211 = vmatpush1.msra.mxu0 %v1210
        %1212 = vmatprep.subr.mxu0 0.0
        %v1213 = vand.u32 %v218, 4294901760
        %v1214 = vsub.f32 %v218, %v1213
        %1215 = vmatpush1.msra.mxu0 %v1214
        %1216 = vmatprep.subr.mxu0 0.0
        %v1217 = vand.u32 %v219, 4294901760
        %v1218 = vsub.f32 %v219, %v1217
        %1219 = vmatpush1.msra.mxu0 %v1218
        %1220 = vmatprep.subr.mxu0 0.0
        %v1221 = vand.u32 %v220, 4294901760
        %v1222 = vsub.f32 %v220, %v1221
        %1223 = vmatpush1.msra.mxu0 %v1222
        %1224 = vmatprep.subr.mxu0 0.0
        %v1225 = vand.u32 %v221, 4294901760
        %v1226 = vsub.f32 %v221, %v1225
        %1227 = vmatpush1.msra.mxu0 %v1226
        %1228 = vmatprep.subr.mxu0 0.0
        %v1229 = vand.u32 %v222, 4294901760
        %v1230 = vsub.f32 %v222, %v1229
        %1231 = vmatpush1.msra.mxu0 %v1230
        %1232 = vmatprep.subr.mxu0 0.0
        %v1233 = vand.u32 %v223, 4294901760
        %v1234 = vsub.f32 %v223, %v1233
        %1235 = vmatpush1.msra.mxu0 %v1234
        %1236 = vmatprep.subr.mxu0 0.0
        %1237 = vmatpush1.msra.mxu0 0.0
        %1238 = vmatprep.subr.mxu0 0.0
        %1239 = vmatpush1.msra.mxu0 0.0
        %1240 = vmatprep.subr.mxu0 0.0
        %1241 = vmatpush1.msra.mxu0 0.0
        %1242 = vmatprep.subr.mxu0 0.0
        %1243 = vmatpush1.msra.mxu0 0.0
        %1244 = vmatprep.subr.mxu0 0.0
        %1245 = vmatpush1.msra.mxu0 0.0
        %1246 = vmatprep.subr.mxu0 0.0
        %1247 = vmatpush1.msra.mxu0 0.0
        %1248 = vmatprep.subr.mxu0 0.0
        %1249 = vmatpush1.msra.mxu0 0.0
        %1250 = vmatprep.subr.mxu0 0.0
        %1251 = vmatpush1.msra.mxu0 0.0
        %1252 = vmatprep.subr.mxu0 0.0
        %1253 = vmatpush1.msra.mxu0 0.0
        %1254 = vmatprep.subr.mxu0 0.0
        %1255 = vmatpush1.msra.mxu0 0.0
        %1256 = vmatprep.subr.mxu0 0.0
        %1257 = vmatpush1.msra.mxu0 0.0
        %1258 = vmatprep.subr.mxu0 0.0
        %1259 = vmatpush1.msra.mxu0 0.0
        %1260 = vmatprep.subr.mxu0 0.0
        %1261 = vmatpush1.msra.mxu0 0.0
        %1262 = vmatprep.subr.mxu0 0.0
        %1263 = vmatpush1.msra.mxu0 0.0
        %1264 = vmatprep.subr.mxu0 0.0
        %1265 = vmatpush1.msra.mxu0 0.0
        %1266 = vmatprep.subr.mxu0 0.0
        %1267 = vmatpush1.msra.mxu0 0.0
        %1268 = vmatprep.mubr.f32.mxu0 0.0
        %v1269 = vand.u32 %v912, 4294901760
        %v1270 = vsub.f32 %v912, %v1269
        %1271 = vmatmul.mubr.f32.gmra.mrb[0].mxu0 %v1270
        %v1272 = vpop.f32.mrb[0].mxu0
        %v1273 = vadd.f32 %v1163, %v1272
        %v1274 = vpop.f32.mrb[0].mxu0
        %1275 = vmatprep.mubr.f32.mxu0 0.0
        %v1276 = vand.u32 %v913, 4294901760
        %v1277 = vsub.f32 %v913, %v1276
        %1278 = vmatmul.mubr.f32.gmra.mrb[0].mxu0 %v1277
        %v1279 = vpop.f32.mrb[0].mxu0
        %v1280 = vadd.f32 %v1169, %v1279
        %v1281 = vpop.f32.mrb[0].mxu0
        %1282 = vdwg.mxu0
        %1283 = vmatprep.subr.mxu0 0.0
        %v1284 = vand.u32 %v208, 4294901760
        %1285 = vmatpush1.msra.mxu0 %v1284
        %1286 = vmatprep.subr.mxu0 0.0
        %v1287 = vand.u32 %v209, 4294901760
        %1288 = vmatpush1.msra.mxu0 %v1287
        %1289 = vmatprep.subr.mxu0 0.0
        %v1290 = vand.u32 %v210, 4294901760
        %1291 = vmatpush1.msra.mxu0 %v1290
        %1292 = vmatprep.subr.mxu0 0.0
        %v1293 = vand.u32 %v211, 4294901760
        %1294 = vmatpush1.msra.mxu0 %v1293
        %1295 = vmatprep.subr.mxu0 0.0
        %v1296 = vand.u32 %v212, 4294901760
        %1297 = vmatpush1.msra.mxu0 %v1296
        %1298 = vmatprep.subr.mxu0 0.0
        %v1299 = vand.u32 %v213, 4294901760
        %1300 = vmatpush1.msra.mxu0 %v1299
        %1301 = vmatprep.subr.mxu0 0.0
        %v1302 = vand.u32 %v214, 4294901760
        %1303 = vmatpush1.msra.mxu0 %v1302
        %1304 = vmatprep.subr.mxu0 0.0
        %v1305 = vand.u32 %v215, 4294901760
        %1306 = vmatpush1.msra.mxu0 %v1305
        %1307 = vmatprep.subr.mxu0 0.0
        %v1308 = vand.u32 %v216, 4294901760
        %1309 = vmatpush1.msra.mxu0 %v1308
        %1310 = vmatprep.subr.mxu0 0.0
        %v1311 = vand.u32 %v217, 4294901760
        %1312 = vmatpush1.msra.mxu0 %v1311
        %1313 = vmatprep.subr.mxu0 0.0
        %v1314 = vand.u32 %v218, 4294901760
        %1315 = vmatpush1.msra.mxu0 %v1314
        %1316 = vmatprep.subr.mxu0 0.0
        %v1317 = vand.u32 %v219, 4294901760
        %1318 = vmatpush1.msra.mxu0 %v1317
        %1319 = vmatprep.subr.mxu0 0.0
        %v1320 = vand.u32 %v220, 4294901760
        %1321 = vmatpush1.msra.mxu0 %v1320
        %1322 = vmatprep.subr.mxu0 0.0
        %v1323 = vand.u32 %v221, 4294901760
        %1324 = vmatpush1.msra.mxu0 %v1323
        %1325 = vmatprep.subr.mxu0 0.0
        %v1326 = vand.u32 %v222, 4294901760
        %1327 = vmatpush1.msra.mxu0 %v1326
        %1328 = vmatprep.subr.mxu0 0.0
        %v1329 = vand.u32 %v223, 4294901760
        %1330 = vmatpush1.msra.mxu0 %v1329
        %1331 = vmatprep.subr.mxu0 0.0
        %1332 = vmatpush1.msra.mxu0 0.0
        %1333 = vmatprep.subr.mxu0 0.0
        %1334 = vmatpush1.msra.mxu0 0.0
        %1335 = vmatprep.subr.mxu0 0.0
        %1336 = vmatpush1.msra.mxu0 0.0
        %1337 = vmatprep.subr.mxu0 0.0
        %1338 = vmatpush1.msra.mxu0 0.0
        %1339 = vmatprep.subr.mxu0 0.0
        %1340 = vmatpush1.msra.mxu0 0.0
        %1341 = vmatprep.subr.mxu0 0.0
        %1342 = vmatpush1.msra.mxu0 0.0
        %1343 = vmatprep.subr.mxu0 0.0
        %1344 = vmatpush1.msra.mxu0 0.0
        %1345 = vmatprep.subr.mxu0 0.0
        %1346 = vmatpush1.msra.mxu0 0.0
        %1347 = vmatprep.subr.mxu0 0.0
        %1348 = vmatpush1.msra.mxu0 0.0
        %1349 = vmatprep.subr.mxu0 0.0
        %1350 = vmatpush1.msra.mxu0 0.0
        %1351 = vmatprep.subr.mxu0 0.0
        %1352 = vmatpush1.msra.mxu0 0.0
        %1353 = vmatprep.subr.mxu0 0.0
        %1354 = vmatpush1.msra.mxu0 0.0
        %1355 = vmatprep.subr.mxu0 0.0
        %1356 = vmatpush1.msra.mxu0 0.0
        %1357 = vmatprep.subr.mxu0 0.0
        %1358 = vmatpush1.msra.mxu0 0.0
        %1359 = vmatprep.subr.mxu0 0.0
        %1360 = vmatpush1.msra.mxu0 0.0
        %1361 = vmatprep.subr.mxu0 0.0
        %1362 = vmatpush1.msra.mxu0 0.0
        %1363 = vmatprep.mubr.f32.mxu0 0.0
        %v1364 = vand.u32 %v912, 4294901760
        %v1365 = vsub.f32 %v912, %v1364
        %v1366 = vand.u32 %v1365, 4294901760
        %1367 = vmatmul.mubr.f32.gmra.mrb[0].mxu0 %v1366
        %v1368 = vpop.f32.mrb[0].mxu0
        %v1369 = vadd.f32 %v1273, %v1368
        %v1370 = vpop.f32.mrb[0].mxu0
        %1371 = vmatprep.mubr.f32.mxu0 0.0
        %v1372 = vand.u32 %v913, 4294901760
        %v1373 = vsub.f32 %v913, %v1372
        %v1374 = vand.u32 %v1373, 4294901760
        %1375 = vmatmul.mubr.f32.gmra.mrb[0].mxu0 %v1374
        %v1376 = vpop.f32.mrb[0].mxu0
        %v1377 = vadd.f32 %v1280, %v1376
        %v1378 = vpop.f32.mrb[0].mxu0
        %1379 = vdwg.mxu0
        %1380 = vmatprep.subr.mxu0 0.0
        %v1381 = vand.u32 %v208, 4294901760
        %v1382 = vsub.f32 %v208, %v1381
        %v1383 = vand.u32 %v1382, 4294901760
        %1384 = vmatpush1.msra.mxu0 %v1383
        %1385 = vmatprep.subr.mxu0 0.0
        %v1386 = vand.u32 %v209, 4294901760
        %v1387 = vsub.f32 %v209, %v1386
        %v1388 = vand.u32 %v1387, 4294901760
        %1389 = vmatpush1.msra.mxu0 %v1388
        %1390 = vmatprep.subr.mxu0 0.0
        %v1391 = vand.u32 %v210, 4294901760
        %v1392 = vsub.f32 %v210, %v1391
        %v1393 = vand.u32 %v1392, 4294901760
        %1394 = vmatpush1.msra.mxu0 %v1393
        %1395 = vmatprep.subr.mxu0 0.0
        %v1396 = vand.u32 %v211, 4294901760
        %v1397 = vsub.f32 %v211, %v1396
        %v1398 = vand.u32 %v1397, 4294901760
        %1399 = vmatpush1.msra.mxu0 %v1398
        %1400 = vmatprep.subr.mxu0 0.0
        %v1401 = vand.u32 %v212, 4294901760
        %v1402 = vsub.f32 %v212, %v1401
        %v1403 = vand.u32 %v1402, 4294901760
        %1404 = vmatpush1.msra.mxu0 %v1403
        %1405 = vmatprep.subr.mxu0 0.0
        %v1406 = vand.u32 %v213, 4294901760
        %v1407 = vsub.f32 %v213, %v1406
        %v1408 = vand.u32 %v1407, 4294901760
        %1409 = vmatpush1.msra.mxu0 %v1408
        %1410 = vmatprep.subr.mxu0 0.0
        %v1411 = vand.u32 %v214, 4294901760
        %v1412 = vsub.f32 %v214, %v1411
        %v1413 = vand.u32 %v1412, 4294901760
        %1414 = vmatpush1.msra.mxu0 %v1413
        %1415 = vmatprep.subr.mxu0 0.0
        %v1416 = vand.u32 %v215, 4294901760
        %v1417 = vsub.f32 %v215, %v1416
        %v1418 = vand.u32 %v1417, 4294901760
        %1419 = vmatpush1.msra.mxu0 %v1418
        %1420 = vmatprep.subr.mxu0 0.0
        %v1421 = vand.u32 %v216, 4294901760
        %v1422 = vsub.f32 %v216, %v1421
        %v1423 = vand.u32 %v1422, 4294901760
        %1424 = vmatpush1.msra.mxu0 %v1423
        %1425 = vmatprep.subr.mxu0 0.0
        %v1426 = vand.u32 %v217, 4294901760
        %v1427 = vsub.f32 %v217, %v1426
        %v1428 = vand.u32 %v1427, 4294901760
        %1429 = vmatpush1.msra.mxu0 %v1428
        %1430 = vmatprep.subr.mxu0 0.0
        %v1431 = vand.u32 %v218, 4294901760
        %v1432 = vsub.f32 %v218, %v1431
        %v1433 = vand.u32 %v1432, 4294901760
        %1434 = vmatpush1.msra.mxu0 %v1433
        %1435 = vmatprep.subr.mxu0 0.0
        %v1436 = vand.u32 %v219, 4294901760
        %v1437 = vsub.f32 %v219, %v1436
        %v1438 = vand.u32 %v1437, 4294901760
        %1439 = vmatpush1.msra.mxu0 %v1438
        %1440 = vmatprep.subr.mxu0 0.0
        %v1441 = vand.u32 %v220, 4294901760
        %v1442 = vsub.f32 %v220, %v1441
        %v1443 = vand.u32 %v1442, 4294901760
        %1444 = vmatpush1.msra.mxu0 %v1443
        %1445 = vmatprep.subr.mxu0 0.0
        %v1446 = vand.u32 %v221, 4294901760
        %v1447 = vsub.f32 %v221, %v1446
        %v1448 = vand.u32 %v1447, 4294901760
        %1449 = vmatpush1.msra.mxu0 %v1448
        %1450 = vmatprep.subr.mxu0 0.0
        %v1451 = vand.u32 %v222, 4294901760
        %v1452 = vsub.f32 %v222, %v1451
        %v1453 = vand.u32 %v1452, 4294901760
        %1454 = vmatpush1.msra.mxu0 %v1453
        %1455 = vmatprep.subr.mxu0 0.0
        %v1456 = vand.u32 %v223, 4294901760
        %v1457 = vsub.f32 %v223, %v1456
        %v1458 = vand.u32 %v1457, 4294901760
        %1459 = vmatpush1.msra.mxu0 %v1458
        %1460 = vmatprep.subr.mxu0 0.0
        %1461 = vmatpush1.msra.mxu0 0.0
        %1462 = vmatprep.subr.mxu0 0.0
        %1463 = vmatpush1.msra.mxu0 0.0
        %1464 = vmatprep.subr.mxu0 0.0
        %1465 = vmatpush1.msra.mxu0 0.0
        %1466 = vmatprep.subr.mxu0 0.0
        %1467 = vmatpush1.msra.mxu0 0.0
        %1468 = vmatprep.subr.mxu0 0.0
        %1469 = vmatpush1.msra.mxu0 0.0
        %1470 = vmatprep.subr.mxu0 0.0
        %1471 = vmatpush1.msra.mxu0 0.0
        %1472 = vmatprep.subr.mxu0 0.0
        %1473 = vmatpush1.msra.mxu0 0.0
        %1474 = vmatprep.subr.mxu0 0.0
        %1475 = vmatpush1.msra.mxu0 0.0
        %1476 = vmatprep.subr.mxu0 0.0
        %1477 = vmatpush1.msra.mxu0 0.0
        %1478 = vmatprep.subr.mxu0 0.0
        %1479 = vmatpush1.msra.mxu0 0.0
        %1480 = vmatprep.subr.mxu0 0.0
        %1481 = vmatpush1.msra.mxu0 0.0
        %1482 = vmatprep.subr.mxu0 0.0
        %1483 = vmatpush1.msra.mxu0 0.0
        %1484 = vmatprep.subr.mxu0 0.0
        %1485 = vmatpush1.msra.mxu0 0.0
        %1486 = vmatprep.subr.mxu0 0.0
        %1487 = vmatpush1.msra.mxu0 0.0
        %1488 = vmatprep.subr.mxu0 0.0
        %1489 = vmatpush1.msra.mxu0 0.0
        %1490 = vmatprep.subr.mxu0 0.0
        %1491 = vmatpush1.msra.mxu0 0.0
        %1492 = vmatprep.mubr.f32.mxu0 0.0
        %v1493 = vand.u32 %v912, 4294901760
        %1494 = vmatmul.mubr.f32.gmra.mrb[0].mxu0 %v1493
        %v1495 = vpop.f32.mrb[0].mxu0
        %v1496 = vadd.f32 %v1369, %v1495
        %v1497 = vpop.f32.mrb[0].mxu0
        %1498 = vmatprep.mubr.f32.mxu0 0.0
        %v1499 = vand.u32 %v913, 4294901760
        %1500 = vmatmul.mubr.f32.gmra.mrb[0].mxu0 %v1499
        %v1501 = vpop.f32.mrb[0].mxu0
        %v1502 = vadd.f32 %v1377, %v1501
        %v1503 = vpop.f32.mrb[0].mxu0
        %1504 = vdwg.mxu0
        %1505 = vmatprep.subr.mxu0 0.0
        %v1506 = vand.u32 %v208, 4294901760
        %1507 = vmatpush1.msra.mxu0 %v1506
        %1508 = vmatprep.subr.mxu0 0.0
        %v1509 = vand.u32 %v209, 4294901760
        %1510 = vmatpush1.msra.mxu0 %v1509
        %1511 = vmatprep.subr.mxu0 0.0
        %v1512 = vand.u32 %v210, 4294901760
        %1513 = vmatpush1.msra.mxu0 %v1512
        %1514 = vmatprep.subr.mxu0 0.0
        %v1515 = vand.u32 %v211, 4294901760
        %1516 = vmatpush1.msra.mxu0 %v1515
        %1517 = vmatprep.subr.mxu0 0.0
        %v1518 = vand.u32 %v212, 4294901760
        %1519 = vmatpush1.msra.mxu0 %v1518
        %1520 = vmatprep.subr.mxu0 0.0
        %v1521 = vand.u32 %v213, 4294901760
        %1522 = vmatpush1.msra.mxu0 %v1521
        %1523 = vmatprep.subr.mxu0 0.0
        %v1524 = vand.u32 %v214, 4294901760
        %1525 = vmatpush1.msra.mxu0 %v1524
        %1526 = vmatprep.subr.mxu0 0.0
        %v1527 = vand.u32 %v215, 4294901760
        %1528 = vmatpush1.msra.mxu0 %v1527
        %1529 = vmatprep.subr.mxu0 0.0
        %v1530 = vand.u32 %v216, 4294901760
        %1531 = vmatpush1.msra.mxu0 %v1530
        %1532 = vmatprep.subr.mxu0 0.0
        %v1533 = vand.u32 %v217, 4294901760
        %1534 = vmatpush1.msra.mxu0 %v1533
        %1535 = vmatprep.subr.mxu0 0.0
        %v1536 = vand.u32 %v218, 4294901760
        %1537 = vmatpush1.msra.mxu0 %v1536
        %1538 = vmatprep.subr.mxu0 0.0
        %v1539 = vand.u32 %v219, 4294901760
        %1540 = vmatpush1.msra.mxu0 %v1539
        %1541 = vmatprep.subr.mxu0 0.0
        %v1542 = vand.u32 %v220, 4294901760
        %1543 = vmatpush1.msra.mxu0 %v1542
        %1544 = vmatprep.subr.mxu0 0.0
        %v1545 = vand.u32 %v221, 4294901760
        %1546 = vmatpush1.msra.mxu0 %v1545
        %1547 = vmatprep.subr.mxu0 0.0
        %v1548 = vand.u32 %v222, 4294901760
        %1549 = vmatpush1.msra.mxu0 %v1548
        %1550 = vmatprep.subr.mxu0 0.0
        %v1551 = vand.u32 %v223, 4294901760
        %1552 = vmatpush1.msra.mxu0 %v1551
        %1553 = vmatprep.subr.mxu0 0.0
        %1554 = vmatpush1.msra.mxu0 0.0
        %1555 = vmatprep.subr.mxu0 0.0
        %1556 = vmatpush1.msra.mxu0 0.0
        %1557 = vmatprep.subr.mxu0 0.0
        %1558 = vmatpush1.msra.mxu0 0.0
        %1559 = vmatprep.subr.mxu0 0.0
        %1560 = vmatpush1.msra.mxu0 0.0
        %1561 = vmatprep.subr.mxu0 0.0
        %1562 = vmatpush1.msra.mxu0 0.0
        %1563 = vmatprep.subr.mxu0 0.0
        %1564 = vmatpush1.msra.mxu0 0.0
        %1565 = vmatprep.subr.mxu0 0.0
        %1566 = vmatpush1.msra.mxu0 0.0
        %1567 = vmatprep.subr.mxu0 0.0
        %1568 = vmatpush1.msra.mxu0 0.0
        %1569 = vmatprep.subr.mxu0 0.0
        %1570 = vmatpush1.msra.mxu0 0.0
        %1571 = vmatprep.subr.mxu0 0.0
        %1572 = vmatpush1.msra.mxu0 0.0
        %1573 = vmatprep.subr.mxu0 0.0
        %1574 = vmatpush1.msra.mxu0 0.0
        %1575 = vmatprep.subr.mxu0 0.0
        %1576 = vmatpush1.msra.mxu0 0.0
        %1577 = vmatprep.subr.mxu0 0.0
        %1578 = vmatpush1.msra.mxu0 0.0
        %1579 = vmatprep.subr.mxu0 0.0
        %1580 = vmatpush1.msra.mxu0 0.0
        %1581 = vmatprep.subr.mxu0 0.0
        %1582 = vmatpush1.msra.mxu0 0.0
        %1583 = vmatprep.subr.mxu0 0.0
        %1584 = vmatpush1.msra.mxu0 0.0
        %1585 = vmatprep.mubr.f32.mxu0 0.0
        %v1586 = vand.u32 %v912, 4294901760
        %1587 = vmatmul.mubr.f32.gmra.mrb[0].mxu0 %v1586
        %v1588 = vpop.f32.mrb[0].mxu0
        %v1589 = vadd.f32 %v1496, %v1588
        %v1590 = vpop.f32.mrb[0].mxu0
        %1591 = vmatprep.mubr.f32.mxu0 0.0
        %v1592 = vand.u32 %v913, 4294901760
        %1593 = vmatmul.mubr.f32.gmra.mrb[0].mxu0 %v1592
        %v1594 = vpop.f32.mrb[0].mxu0
        %v1595 = vadd.f32 %v1502, %v1594
        %v1596 = vpop.f32.mrb[0].mxu0
        %1597 = vdwg.mxu0
        %v1598 = vmul.f32 %v1589, 0.03125
        %v1599 = vmul.f32 %v1595, 0.03125
        %v1600 = vadd.f32 %v1598, 1e-05
        %v1601 = vadd.f32 %v1599, 1e-05
        %v1602 = vrsqrt.pop %v1600
        %v1603 = vrsqrt.pop %v1601
        %v1604 = vld [vmem:[%s1] sm:$0x1]
        %v1605 = vmul.f32 %v206, %v1602
        %v1606 = vmul.f32 %v207, %v1603
        %v1608 = vlaneseq
        %v1609 = vshrl.u32 %v1608, 7
        %v1610 = vsub.s32 0, %v1609
        %v1611 = vrot.slane %v1604, %v1610
        %v1613 = vmul.f32 %v1605, %v1611
        %v1614 = vmul.f32 %v1606, %v1611
        %1615 = vst [vmem:[%s203] sm:$0xff] %v1613
        %1616 = vst [vmem:[%s203 + $0x8] sm:$0xff] %v1614
        %s1617 = sand.u32 %s97, 1
        %s1618 = scalar_lea.sflag [#allocation4], %s1617
        %s1619 = sand.u32 %s97, 1
        %s1620 = smul.addr %s1619, 16
        %s1621 = scalar_lea.vmem [#allocation7], %s1620
        // Predicated region
        $region41: #{tpu_custom_call.1} parent=31 // pred_check
          %p1622 = pneg %p107
        $region42: #{tpu_custom_call.1} parent=31 // pred_check_branch
          %1624 = sbr.rel (%p1622) target = $region44
        $region43: #{tpu_custom_call.1} parent=31 // pred_region
          %s1625 = smul.u32 2, %s21
          %s1627 = ssub.s32 256, 256
          %1628 = vsyncadd %s1618, %s1627
          %s1629 = smul.addr %s1625, 128
          %s1630 = scalar_lea.hbm %s3, %s1629
          %s1631 = sshll.u32 %s1621, 4
          %s1632 = int_to_ptr.vmem [resolvable:$true] %s1631
          %1637 = dma.vmem_to_hbm [thread:$0]  %s1632, 256, %s1630, %s1618, 128, 128, 8
        $region44: #{tpu_custom_call.1} parent=31 // pred_fallthru
          _
      $region32: #{tpu_custom_call.1} parent=5 // pred_fallthru
        _
      %p1638 = scmp.le.s32.totalorder 2, %s16
      // Predicated region
      $region45: #{tpu_custom_call.1} parent=5 // pred_check
        %p1639 = pneg %p1638
      $region46: #{tpu_custom_call.1} parent=5 // pred_check_branch
        %1641 = sbr.rel (%p1639) target = $region48
      $region47: #{tpu_custom_call.1} parent=5 // pred_region
        %s1642 = ssub.s32 %s16, 2
        // Predicated region
        $region49: #{tpu_custom_call.1} parent=47 // pred_check
          %p1643 = pneg %p113
        $region50: #{tpu_custom_call.1} parent=47 // pred_check_branch
          %1645 = sbr.rel (%p1643) target = $region52
        $region51: #{tpu_custom_call.1} parent=47 // pred_region
          %s1646 = sand.u32 %s98, 1
          %s1647 = scalar_lea.sflag [#allocation4], %s1646
          %s1648 = sand.u32 %s98, 1
          %s1649 = smul.addr %s1648, 16
          %s1650 = scalar_lea.vmem [#allocation7], %s1649
          %1651 = dma.done %s1647, 256
        $region52: #{tpu_custom_call.1} parent=47 // pred_fallthru
          _
      $region48: #{tpu_custom_call.1} parent=5 // pred_fallthru
        _
    $region6: #{tpu_custom_call.1} parent=1 // loop_footer
      %s20 = sadd.s32 1, %s16
    $region7: #{tpu_custom_call.1} parent=1 // loop_footer_branch
      %15 = sbr.rel target = $region3
    $region8: #{tpu_custom_call.1} parent=1 // loop_exit
      _
    %1652 = vsyncpa [#allocation3], 1
    %s1653 = scalar_lea.sflag [#allocation3], 1
    %1654 = vsyncpa %s1653, 1
    %1655 = vsyncpa [#allocation6], 1
    %1656 = vsyncpa [#allocation4], 1
    %s1657 = scalar_lea.sflag [#allocation4], 1
    %1658 = vsyncpa %s1657, 1

</llo_original>
